<compile_context>
chip_gen: v5e
topology: v5e:2x2
jax: 0.10.0
libtpu: 0.0.40
codegen_flags: <defaults>
</compile_context>

<pallas_src>
import functools

import jax
import jax.numpy as jnp
import numpy as np
from jax.experimental import pallas as pl
from jax.experimental.pallas import tpu as pltpu


def gpt2_attn_kernel(x_ref, wq_ref, bq_ref, wk_ref, bk_ref, wv_ref, bv_ref,
                     wp_ref, bp_ref, o_ref,
                     k_scr, v_scr, m_scr, l_scr, acc_scr,
                     *, heads, mask, tq, approx_recip):
    """One (batch, query-block) tile per grid step.

    x_ref : (t, e)            full-sequence slab of the input for this batch
    w*_ref: (e, e) / (1, e)   projection weights ((in, out) layout) and biases
    o_ref : (tq, e)           output block
    k_scr, v_scr: (heads, t, hd)  head-split K/V, filled once per batch (qi == 0)
    m_scr, l_scr, acc_scr:    online-softmax state for the current query block
    """
    t, e = x_ref.shape
    hd = e // heads
    n_kv = t // tq
    qi = pl.program_id(1)
    cdt = x_ref.dtype                       # matmul-operand dtype (bf16 in prod)

    # ---- K/V projection + head split: ONCE per batch element ----------------
    @pl.when(qi == 0)
    def _():
        x = x_ref[...]
        k = jnp.dot(x, wk_ref[...], preferred_element_type=jnp.float32) + bk_ref[...]
        v = jnp.dot(x, wv_ref[...], preferred_element_type=jnp.float32) + bv_ref[...]
        k_scr[...] = pltpu.einshape("thd->htd", k.reshape(t, heads, hd)).astype(k_scr.dtype)
        v_scr[...] = pltpu.einshape("thd->htd", v.reshape(t, heads, hd)).astype(v_scr.dtype)

    # ---- Q projection for this query block (1/sqrt(hd) folded into W_q) -----
    q0 = pl.multiple_of(qi * tq, tq)
    xq = x_ref[pl.ds(q0, tq), :]
    q = jnp.dot(xq, wq_ref[...], preferred_element_type=jnp.float32) + bq_ref[...]
    q3 = pltpu.einshape("thd->htd", q.reshape(tq, heads, hd)).astype(cdt)   # (h, tq, hd)

    # ---- KV-tiled online softmax (flash-style); all state in float32 --------
    m_scr[...] = jnp.full(m_scr.shape, -1e30, dtype=jnp.float32)
    l_scr[...] = jnp.zeros(l_scr.shape, dtype=jnp.float32)
    acc_scr[...] = jnp.zeros(acc_scr.shape, dtype=jnp.float32)

    def kv_step(j, carry):
        k0 = pl.multiple_of(j * tq, tq)
        kb = k_scr[:, pl.ds(k0, tq), :]                        # (h, tq, hd)
        vb = v_scr[:, pl.ds(k0, tq), :]
        # TODO(synk): verify with pl.lower_as_mlir that these lower to a single
        # batched MXU matmul (hd underfills the 256-wide MXU; the e x e
        # projections above carry the throughput).
        s = jnp.einsum("hqd,hkd->hqk", q3, kb,
                       preferred_element_type=jnp.float32)     # (h, tq, tq)
        if mask:
            # Causal, mask_diagonal=False: key col > query row  ->  masked out.
            row = jax.lax.broadcasted_iota(jnp.int32, (tq, tq), 0) + qi * tq
            col = jax.lax.broadcasted_iota(jnp.int32, (tq, tq), 1) + j * tq
            s = jnp.where((col > row)[None, :, :], jnp.float32(-1e30), s)
        m_prev = m_scr[...]
        m_new = jnp.maximum(m_prev, jnp.max(s, axis=-1, keepdims=True))
        alpha = jnp.exp(m_prev - m_new)
        p = jnp.exp(s - m_new)
        l_scr[...] = alpha * l_scr[...] + jnp.sum(p, axis=-1, keepdims=True)
        acc_scr[...] = alpha * acc_scr[...] + jnp.einsum(
            "hqk,hkd->hqd", p.astype(cdt), vb,
            preferred_element_type=jnp.float32)                # (h, tq, hd)
        m_scr[...] = m_new
        return carry

    # Causal: only KV tiles at or below the current query tile contribute.
    trips = (qi + 1) if mask else n_kv
    jax.lax.fori_loop(0, trips, kv_step, 0)

    # ---- normalize, merge heads, output projection ---------------------------
    out_h = acc_scr[...] * pl.reciprocal(l_scr[...], approx=approx_recip)
    # TODO(synk): if bundle dumps show XLU (not MXU) as the binding slot, replace
    # this merge transpose with a head-batched c_proj contraction instead.
    a = pltpu.einshape("htd->thd", out_h).reshape(tq, e).astype(cdt)
    o_ref[...] = (jnp.dot(a, wp_ref[...], preferred_element_type=jnp.float32)
                  + bp_ref[...]).astype(o_ref.dtype)


def _vmem_limit_bytes():
    """Explicit scoped-VMEM limit: raise v5e/v6e's small defaults, keep headroom
    below v7x's 64 MiB physical capacity."""
    cap = 64 << 20
    try:
        cap = int(pltpu.get_tpu_info().vmem_capacity_bytes)
    except Exception:
        pass
    return max(32 << 20, min(cap - (8 << 20), 112 << 20))


def _pick_query_tile(t, cap=256):
    """Largest divisor of t that is <= cap and keeps (8,128) tiling legal."""
    best = 0
    for d in range(1, min(t, cap) + 1):
        if t % d == 0 and (d % 8 == 0 or d == t):
            best = d
    # TODO(synk): pad the query axis instead of falling back to the full sequence
    # when t has no usable divisor (rare non-multiple-of-8 lengths).
    return best if best > 0 else t


def self_attention_gpt2(x, w_attn, b_attn, w_proj, b_proj, *, heads,
                        mask=False, tq=None, approx_recip=True):
    """x: (b, t, e).  w_attn: (e, 3e), b_attn: (3e,), w_proj: (e, e), b_proj: (e,)."""
    b, t, e = x.shape
    assert e % heads == 0, "emb must be divisible by heads"
    hd = e // heads

    if tq is None:
        tq = _pick_query_tile(t)
    assert t % tq == 0
    nq = t // tq

    # Split the fused c_attn parameters host-side (free) and fold the 1/sqrt(hd)
    # attention scale into W_q / b_q (exact for power-of-two head dims).
    scale = 1.0 / float(hd) ** 0.5
    w_q = w_attn[:, :e] * scale
    w_k = w_attn[:, e:2 * e]
    w_v = w_attn[:, 2 * e:]
    b_q = (b_attn[:e] * scale).reshape(1, e)
    b_k = b_attn[e:2 * e].reshape(1, e)
    b_v = b_attn[2 * e:].reshape(1, e)
    b_p = b_proj.reshape(1, e)

    kernel = functools.partial(gpt2_attn_kernel, heads=heads, mask=mask,
                               tq=tq, approx_recip=approx_recip)

    # Constant-index operands: resident in VMEM and single-buffered.
    const = lambda bi, qi: (0, 0)
    one_buf = pl.Buffered(1)
    w_spec = lambda: pl.BlockSpec((e, e), const, pipeline_mode=one_buf)
    b_spec = lambda: pl.BlockSpec((1, e), const, pipeline_mode=one_buf)

    # Advisory cost estimate for XLA's scheduler around the custom call.
    attn_frac = 0.5 if mask else 1.0
    flops = int(b * (2 * t * e * 3 * e + 2 * t * e * e
                     + attn_frac * 4 * heads * t * t * hd))
    transcendentals = int(b * heads * t * t * attn_frac)
    bytes_accessed = int(2 * b * t * e * x.dtype.itemsize
                         + (4 * e * e + 6 * e) * w_attn.dtype.itemsize)

    # TODO(synk): if production can have b == 1, fill the K/V scratch on each
    # core's first query block instead so the qi axis can be marked "parallel".
    return pl.pallas_call(
        kernel,
        out_shape=jax.ShapeDtypeStruct((b, t, e), x.dtype),
        grid=(b, nq),
        in_specs=[
            pl.BlockSpec((None, t, e), lambda bi, qi: (bi, 0, 0),
                         pipeline_mode=one_buf),                # x, full sequence
            w_spec(), b_spec(),                                  # W_q, b_q (pre-scaled)
            w_spec(), b_spec(),                                  # W_k, b_k
            w_spec(), b_spec(),                                  # W_v, b_v
            w_spec(), b_spec(),                                  # W_proj, b_proj
        ],
        out_specs=pl.BlockSpec((None, tq, e), lambda bi, qi: (bi, qi, 0)),
        scratch_shapes=[
            pltpu.VMEM((heads, t, hd), x.dtype),                 # K (head-split)
            pltpu.VMEM((heads, t, hd), x.dtype),                 # V (head-split)
            pltpu.VMEM((heads, tq, 1), jnp.float32),             # running max
            pltpu.VMEM((heads, tq, 1), jnp.float32),             # running denom
            pltpu.VMEM((heads, tq, hd), jnp.float32),            # output accumulator
        ],
        compiler_params=pltpu.CompilerParams(
            dimension_semantics=("parallel", "arbitrary"),
            vmem_limit_bytes=_vmem_limit_bytes()),
        cost_estimate=pl.CostEstimate(flops=flops,
                                      transcendentals=transcendentals,
                                      bytes_accessed=bytes_accessed),
    )(x, w_q, b_q, w_k, b_k, w_v, b_v, w_proj, b_p)


def reference_jax(x, w_attn, b_attn, w_proj, b_proj, *, heads, mask=False):
    """Pure-JAX reference mirroring the PyTorch forward exactly."""
    b, t, e = x.shape
    hd = e // heads
    qkv = x @ w_attn + b_attn
    q, k, v = qkv[..., :e], qkv[..., e:2 * e], qkv[..., 2 * e:]

    def split(z):  # (b, t, e) -> (b, heads, t, hd)
        return z.reshape(b, t, heads, hd).transpose(0, 2, 1, 3)

    q, k, v = split(q), split(k), split(v)
    dot = jnp.einsum('bhqd,bhkd->bhqk', q, k) / float(hd) ** 0.5
    if mask:
        causal = jnp.triu(jnp.ones((t, t), bool), k=1)
        dot = jnp.where(causal, -jnp.inf, dot)
    dot = jax.nn.softmax(dot, axis=-1)
    a = jnp.einsum('bhqk,bhkd->bhqd', dot, v)
    a = a.transpose(0, 2, 1, 3).reshape(b, t, e)
    return a @ w_proj + b_proj


if __name__ == "__main__":
    # Small, lane-friendly shapes: emb multiple of 128; two query blocks (tq=16)
    # so the per-batch K/V scratch reuse and the causal KV-tile skip both run.
    B, T, E, H = 2, 32, 128, 4

    key = jax.random.PRNGKey(0)
    kx, k1, k2, k3, k4 = jax.random.split(key, 5)
    x = jax.random.normal(kx, (B, T, E), dtype=jnp.float32)
    w_attn = 0.02 * jax.random.normal(k1, (E, 3 * E), dtype=jnp.float32)
    b_attn = 0.02 * jax.random.normal(k2, (3 * E,), dtype=jnp.float32)
    w_proj = 0.02 * jax.random.normal(k3, (E, E), dtype=jnp.float32)
    b_proj = 0.02 * jax.random.normal(k4, (E,), dtype=jnp.float32)

    for mask in (False, True):
        with jax.default_matmul_precision("highest"):
            ref = reference_jax(x, w_attn, b_attn, w_proj, b_proj, heads=H, mask=mask)

        # Exact-reciprocal path.
        out = self_attention_gpt2(x, w_attn, b_attn, w_proj, b_proj,
                                  heads=H, mask=mask, tq=16, approx_recip=False)
        out = jax.block_until_ready(out)
        np.testing.assert_allclose(np.asarray(out), np.asarray(ref),
                                   rtol=2e-2, atol=5e-3)

        # Production path: EUP approximate reciprocal in the softmax.
        out_a = self_attention_gpt2(x, w_attn, b_attn, w_proj, b_proj,
                                    heads=H, mask=mask, tq=16, approx_recip=True)
        out_a = jax.block_until_ready(out_a)
        np.testing.assert_allclose(np.asarray(out_a), np.asarray(ref),
                                   rtol=2e-2, atol=5e-3)

    # bf16-operand path (bf16-native MXU on v5e/v6e/v7x): loose sanity check.
    with jax.default_matmul_precision("highest"):
        ref_m = reference_jax(x, w_attn, b_attn, w_proj, b_proj, heads=H, mask=True)
    out_b = self_attention_gpt2(x.astype(jnp.bfloat16),
                                w_attn.astype(jnp.bfloat16),
                                b_attn.astype(jnp.bfloat16),
                                w_proj.astype(jnp.bfloat16),
                                b_proj.astype(jnp.bfloat16),
                                heads=H, mask=True, tq=16)
    out_b = jax.block_until_ready(out_b)
    np.testing.assert_allclose(np.asarray(out_b, dtype=np.float32),
                               np.asarray(ref_m), rtol=1e-1, atol=5e-2)

    print("KERNEL_OK")
</pallas_src>

<mosaic_0001>
module attributes {stable_mosaic.version = 11 : i64} {
  func.func @gpt2_attn_kernel(%arg0: i32, %arg1: i32, %arg2: memref<1x32x128xf32, #tpu.memory_space<vmem>>, %arg3: memref<128x128xf32, #tpu.memory_space<vmem>>, %arg4: memref<1x128xf32, #tpu.memory_space<vmem>>, %arg5: memref<128x128xf32, #tpu.memory_space<vmem>>, %arg6: memref<1x128xf32, #tpu.memory_space<vmem>>, %arg7: memref<128x128xf32, #tpu.memory_space<vmem>>, %arg8: memref<1x128xf32, #tpu.memory_space<vmem>>, %arg9: memref<128x128xf32, #tpu.memory_space<vmem>>, %arg10: memref<1x128xf32, #tpu.memory_space<vmem>>, %arg11: memref<1x16x128xf32, #tpu.memory_space<vmem>>, %arg12: memref<4x32x32xf32, #tpu.memory_space<vmem>>, %arg13: memref<4x32x32xf32, #tpu.memory_space<vmem>>, %arg14: memref<4x16x1xf32, #tpu.memory_space<vmem>>, %arg15: memref<4x16x1xf32, #tpu.memory_space<vmem>>, %arg16: memref<4x16x32xf32, #tpu.memory_space<vmem>>) attributes {dimension_semantics = [#tpu.dimension_semantics<parallel>, #tpu.dimension_semantics<arbitrary>], iteration_bounds = array<i64: 2, 2>, scalar_prefetch = 0 : i64, scratch_operands = 5 : i64, tpu.core_type = #tpu.core_type<tc>, window_params = [{pipeline_mode = #tpu.pipeline_mode<synchronous>, transform_indices = @transform_0, window_bounds = array<i64: 1, 32, 128>}, {pipeline_mode = #tpu.pipeline_mode<synchronous>, transform_indices = @transform_1, window_bounds = array<i64: 128, 128>}, {pipeline_mode = #tpu.pipeline_mode<synchronous>, transform_indices = @transform_2, window_bounds = array<i64: 1, 128>}, {pipeline_mode = #tpu.pipeline_mode<synchronous>, transform_indices = @transform_3, window_bounds = array<i64: 128, 128>}, {pipeline_mode = #tpu.pipeline_mode<synchronous>, transform_indices = @transform_4, window_bounds = array<i64: 1, 128>}, {pipeline_mode = #tpu.pipeline_mode<synchronous>, transform_indices = @transform_5, window_bounds = array<i64: 128, 128>}, {pipeline_mode = #tpu.pipeline_mode<synchronous>, transform_indices = @transform_6, window_bounds = array<i64: 1, 128>}, {pipeline_mode = #tpu.pipeline_mode<synchronous>, transform_indices = @transform_7, window_bounds = array<i64: 128, 128>}, {pipeline_mode = #tpu.pipeline_mode<synchronous>, transform_indices = @transform_8, window_bounds = array<i64: 1, 128>}, {transform_indices = @transform_9, window_bounds = array<i64: 1, 16, 128>}]} {
    %c0_i32 = arith.constant 0 : i32
    %0 = arith.cmpi eq, %arg1, %c0_i32 : i32
    %1 = arith.extui %0 : i1 to i32
    %c0_i32_0 = arith.constant 0 : i32
    %2 = arith.cmpi ne, %1, %c0_i32_0 : i32
    scf.if %2 {
      %c0_34 = arith.constant 0 : index
      %c0_35 = arith.constant 0 : index
      %c0_36 = arith.constant 0 : index
      %37 = vector.load %arg2[%c0_34, %c0_35, %c0_36] : memref<1x32x128xf32, #tpu.memory_space<vmem>>, vector<1x32x128xf32>
      %38 = vector.shape_cast %37 : vector<1x32x128xf32> to vector<32x128xf32>
      %c0_37 = arith.constant 0 : index
      %c0_38 = arith.constant 0 : index
      %39 = vector.load %arg5[%c0_37, %c0_38] : memref<128x128xf32, #tpu.memory_space<vmem>>, vector<128x128xf32>
      %cst_39 = arith.constant dense<0.000000e+00> : vector<32x128xf32>
      %40 = tpu.matmul %38, %39, %cst_39 {dimension_numbers = #tpu.dot_dimension_numbers<[1], [0], [0], [1], [0, 0, 1, 1], [], []>} : vector<32x128xf32>, vector<128x128xf32>, vector<32x128xf32> -> vector<32x128xf32>
      %c0_40 = arith.constant 0 : index
      %c0_41 = arith.constant 0 : index
      %41 = vector.load %arg6[%c0_40, %c0_41] : memref<1x128xf32, #tpu.memory_space<vmem>>, vector<1x128xf32>
      %42 = vector.broadcast %41 : vector<1x128xf32> to vector<32x128xf32>
      %43 = arith.addf %40, %42 : vector<32x128xf32>
      %c0_42 = arith.constant 0 : index
      %c0_43 = arith.constant 0 : index
      %44 = vector.load %arg7[%c0_42, %c0_43] : memref<128x128xf32, #tpu.memory_space<vmem>>, vector<128x128xf32>
      %cst_44 = arith.constant dense<0.000000e+00> : vector<32x128xf32>
      %45 = tpu.matmul %38, %44, %cst_44 {dimension_numbers = #tpu.dot_dimension_numbers<[1], [0], [0], [1], [0, 0, 1, 1], [], []>} : vector<32x128xf32>, vector<128x128xf32>, vector<32x128xf32> -> vector<32x128xf32>
      %c0_45 = arith.constant 0 : index
      %c0_46 = arith.constant 0 : index
      %46 = vector.load %arg8[%c0_45, %c0_46] : memref<1x128xf32, #tpu.memory_space<vmem>>, vector<1x128xf32>
      %47 = vector.broadcast %46 : vector<1x128xf32> to vector<32x128xf32>
      %48 = arith.addf %45, %47 : vector<32x128xf32>
      %49 = vector.shape_cast %43 : vector<32x128xf32> to vector<32x4x32xf32>
      %50 = tpu.transpose %49, [1, 0, 2] : vector<32x4x32xf32> -> vector<4x32x32xf32>
      %c0_47 = arith.constant 0 : index
      %c0_48 = arith.constant 0 : index
      %c0_49 = arith.constant 0 : index
      %51 = vector.load %arg12[%c0_47, %c0_48, %c0_49] : memref<4x32x32xf32, #tpu.memory_space<vmem>>, vector<4x32x32xf32>
      tpu.vector_store %arg12[%c0_47, %c0_48, %c0_49], %50 {strides = array<i32>} : memref<4x32x32xf32, #tpu.memory_space<vmem>>, vector<4x32x32xf32>,
      %52 = vector.shape_cast %48 : vector<32x128xf32> to vector<32x4x32xf32>
      %53 = tpu.transpose %52, [1, 0, 2] : vector<32x4x32xf32> -> vector<4x32x32xf32>
      %c0_50 = arith.constant 0 : index
      %c0_51 = arith.constant 0 : index
      %c0_52 = arith.constant 0 : index
      %54 = vector.load %arg13[%c0_50, %c0_51, %c0_52] : memref<4x32x32xf32, #tpu.memory_space<vmem>>, vector<4x32x32xf32>
      tpu.vector_store %arg13[%c0_50, %c0_51, %c0_52], %53 {strides = array<i32>} : memref<4x32x32xf32, #tpu.memory_space<vmem>>, vector<4x32x32xf32>,
    } else {
    }
    %c16_i32 = arith.constant 16 : i32
    %3 = arith.muli %arg1, %c16_i32 : i32
    %4 = tpu.assume_multiple %3, 16 : i32
    %c0 = arith.constant 0 : index
    %5 = arith.index_cast %4 : i32 to index
    %c0_1 = arith.constant 0 : index
    %6 = vector.load %arg2[%c0, %5, %c0_1] : memref<1x32x128xf32, #tpu.memory_space<vmem>>, vector<1x16x128xf32>
    %7 = vector.shape_cast %6 : vector<1x16x128xf32> to vector<16x128xf32>
    %c0_2 = arith.constant 0 : index
    %c0_3 = arith.constant 0 : index
    %8 = vector.load %arg3[%c0_2, %c0_3] : memref<128x128xf32, #tpu.memory_space<vmem>>, vector<128x128xf32>
    %cst = arith.constant dense<0.000000e+00> : vector<16x128xf32>
    %9 = tpu.matmul %7, %8, %cst {dimension_numbers = #tpu.dot_dimension_numbers<[1], [0], [0], [1], [0, 0, 1, 1], [], []>} : vector<16x128xf32>, vector<128x128xf32>, vector<16x128xf32> -> vector<16x128xf32>
    %c0_4 = arith.constant 0 : index
    %c0_5 = arith.constant 0 : index
    %10 = vector.load %arg4[%c0_4, %c0_5] : memref<1x128xf32, #tpu.memory_space<vmem>>, vector<1x128xf32>
    %11 = vector.broadcast %10 : vector<1x128xf32> to vector<16x128xf32>
    %12 = arith.addf %9, %11 : vector<16x128xf32>
    %13 = vector.shape_cast %12 : vector<16x128xf32> to vector<16x4x32xf32>
    %14 = tpu.transpose %13, [1, 0, 2] : vector<16x4x32xf32> -> vector<4x16x32xf32>
    %cst_6 = arith.constant -1.000000e+30 : f32
    %15 = vector.broadcast %cst_6 : f32 to vector<4x16x1xf32>
    %c0_7 = arith.constant 0 : index
    %c0_8 = arith.constant 0 : index
    %c0_9 = arith.constant 0 : index
    %16 = vector.load %arg14[%c0_7, %c0_8, %c0_9] : memref<4x16x1xf32, #tpu.memory_space<vmem>>, vector<4x16x1xf32>
    tpu.vector_store %arg14[%c0_7, %c0_8, %c0_9], %15 {strides = array<i32>} : memref<4x16x1xf32, #tpu.memory_space<vmem>>, vector<4x16x1xf32>,
    %cst_10 = arith.constant 0.000000e+00 : f32
    %17 = vector.broadcast %cst_10 : f32 to vector<4x16x1xf32>
    %c0_11 = arith.constant 0 : index
    %c0_12 = arith.constant 0 : index
    %c0_13 = arith.constant 0 : index
    %18 = vector.load %arg15[%c0_11, %c0_12, %c0_13] : memref<4x16x1xf32, #tpu.memory_space<vmem>>, vector<4x16x1xf32>
    tpu.vector_store %arg15[%c0_11, %c0_12, %c0_13], %17 {strides = array<i32>} : memref<4x16x1xf32, #tpu.memory_space<vmem>>, vector<4x16x1xf32>,
    %cst_14 = arith.constant 0.000000e+00 : f32
    %19 = vector.broadcast %cst_14 : f32 to vector<4x16x32xf32>
    %c0_15 = arith.constant 0 : index
    %c0_16 = arith.constant 0 : index
    %c0_17 = arith.constant 0 : index
    %20 = vector.load %arg16[%c0_15, %c0_16, %c0_17] : memref<4x16x32xf32, #tpu.memory_space<vmem>>, vector<4x16x32xf32>
    tpu.vector_store %arg16[%c0_15, %c0_16, %c0_17], %19 {strides = array<i32>} : memref<4x16x32xf32, #tpu.memory_space<vmem>>, vector<4x16x32xf32>,
    %c0_i32_18 = arith.constant 0 : i32
    %c2_i32 = arith.constant 2 : i32
    %21 = arith.addi %c0_i32_18, %c2_i32 : i32
    %c1_i32 = arith.constant 1 : i32
    scf.for %arg17 = %c0_i32_18 to %21 step %c1_i32  : i32 {
      %c16_i32_34 = arith.constant 16 : i32
      %37 = arith.muli %arg17, %c16_i32_34 : i32
      %38 = tpu.assume_multiple %37, 16 : i32
      %c0_35 = arith.constant 0 : index
      %39 = arith.index_cast %38 : i32 to index
      %c0_36 = arith.constant 0 : index
      %40 = vector.load %arg12[%c0_35, %39, %c0_36] : memref<4x32x32xf32, #tpu.memory_space<vmem>>, vector<4x16x32xf32>
      %c0_37 = arith.constant 0 : index
      %41 = arith.index_cast %38 : i32 to index
      %c0_38 = arith.constant 0 : index
      %42 = vector.load %arg13[%c0_37, %41, %c0_38] : memref<4x32x32xf32, #tpu.memory_space<vmem>>, vector<4x16x32xf32>
      "tpu.trace_start"() <{level = 10 : i32, message = "hqd,hkd->hqk"}> : () -> ()
      %cst_39 = arith.constant dense<0.000000e+00> : vector<4x16x16xf32>
      %43 = tpu.matmul %14, %40, %cst_39 {dimension_numbers = #tpu.dot_dimension_numbers<[2], [2], [1], [1], [0, 0, 0, 1, 1, 1], [0], [0]>} : vector<4x16x32xf32>, vector<4x16x32xf32>, vector<4x16x16xf32> -> vector<4x16x16xf32>
      "tpu.trace_stop"() : () -> ()
      %c0_40 = arith.constant 0 : index
      %c0_41 = arith.constant 0 : index
      %c0_42 = arith.constant 0 : index
      %44 = vector.load %arg14[%c0_40, %c0_41, %c0_42] : memref<4x16x1xf32, #tpu.memory_space<vmem>>, vector<4x16x1xf32>
      %cst_43 = arith.constant dense<0xFF800000> : vector<4x16xf32>
      %45 = vector.multi_reduction <maximumf>, %43, %cst_43 [2] : vector<4x16x16xf32> to vector<4x16xf32>
      %46 = vector.shape_cast %45 : vector<4x16xf32> to vector<4x16x1xf32>
      %47 = arith.maximumf %44, %46 : vector<4x16x1xf32>
      %48 = arith.subf %44, %47 : vector<4x16x1xf32>
      %49 = math.exp %48 : vector<4x16x1xf32>
      %50 = vector.broadcast %47 : vector<4x16x1xf32> to vector<4x16x16xf32>
      %51 = arith.subf %43, %50 : vector<4x16x16xf32>
      %52 = math.exp %51 : vector<4x16x16xf32>
      %c0_44 = arith.constant 0 : index
      %c0_45 = arith.constant 0 : index
      %c0_46 = arith.constant 0 : index
      %53 = vector.load %arg15[%c0_44, %c0_45, %c0_46] : memref<4x16x1xf32, #tpu.memory_space<vmem>>, vector<4x16x1xf32>
      %54 = arith.mulf %49, %53 : vector<4x16x1xf32>
      %cst_47 = arith.constant dense<0.000000e+00> : vector<4x16xf32>
      %55 = vector.multi_reduction <add>, %52, %cst_47 [2] : vector<4x16x16xf32> to vector<4x16xf32>
      %56 = vector.shape_cast %55 : vector<4x16xf32> to vector<4x16x1xf32>
      %57 = arith.addf %54, %56 : vector<4x16x1xf32>
      %c0_48 = arith.constant 0 : index
      %c0_49 = arith.constant 0 : index
      %c0_50 = arith.constant 0 : index
      %58 = vector.load %arg15[%c0_48, %c0_49, %c0_50] : memref<4x16x1xf32, #tpu.memory_space<vmem>>, vector<4x16x1xf32>
      tpu.vector_store %arg15[%c0_48, %c0_49, %c0_50], %57 {strides = array<i32>} : memref<4x16x1xf32, #tpu.memory_space<vmem>>, vector<4x16x1xf32>,
      %c0_51 = arith.constant 0 : index
      %c0_52 = arith.constant 0 : index
      %c0_53 = arith.constant 0 : index
      %59 = vector.load %arg16[%c0_51, %c0_52, %c0_53] : memref<4x16x32xf32, #tpu.memory_space<vmem>>, vector<4x16x32xf32>
      %60 = vector.broadcast %49 : vector<4x16x1xf32> to vector<4x16x32xf32>
      %61 = arith.mulf %60, %59 : vector<4x16x32xf32>
      "tpu.trace_start"() <{level = 10 : i32, message = "hqk,hkd->hqd"}> : () -> ()
      %cst_54 = arith.constant dense<0.000000e+00> : vector<4x16x32xf32>
      %62 = tpu.matmul %52, %42, %cst_54 {dimension_numbers = #tpu.dot_dimension_numbers<[2], [1], [1], [2], [0, 0, 0, 1, 1, 2], [0], [0]>} : vector<4x16x16xf32>, vector<4x16x32xf32>, vector<4x16x32xf32> -> vector<4x16x32xf32>
      "tpu.trace_stop"() : () -> ()
      %63 = arith.addf %61, %62 : vector<4x16x32xf32>
      %c0_55 = arith.constant 0 : index
      %c0_56 = arith.constant 0 : index
      %c0_57 = arith.constant 0 : index
      %64 = vector.load %arg16[%c0_55, %c0_56, %c0_57] : memref<4x16x32xf32, #tpu.memory_space<vmem>>, vector<4x16x32xf32>
      tpu.vector_store %arg16[%c0_55, %c0_56, %c0_57], %63 {strides = array<i32>} : memref<4x16x32xf32, #tpu.memory_space<vmem>>, vector<4x16x32xf32>,
      %c0_58 = arith.constant 0 : index
      %c0_59 = arith.constant 0 : index
      %c0_60 = arith.constant 0 : index
      %65 = vector.load %arg14[%c0_58, %c0_59, %c0_60] : memref<4x16x1xf32, #tpu.memory_space<vmem>>, vector<4x16x1xf32>
      tpu.vector_store %arg14[%c0_58, %c0_59, %c0_60], %47 {strides = array<i32>} : memref<4x16x1xf32, #tpu.memory_space<vmem>>, vector<4x16x1xf32>,
    }
    %c2_i32_19 = arith.constant 2 : i32
    %c0_20 = arith.constant 0 : index
    %c0_21 = arith.constant 0 : index
    %c0_22 = arith.constant 0 : index
    %22 = vector.load %arg16[%c0_20, %c0_21, %c0_22] : memref<4x16x32xf32, #tpu.memory_space<vmem>>, vector<4x16x32xf32>
    %c0_23 = arith.constant 0 : index
    %c0_24 = arith.constant 0 : index
    %c0_25 = arith.constant 0 : index
    %23 = vector.load %arg15[%c0_23, %c0_24, %c0_25] : memref<4x16x1xf32, #tpu.memory_space<vmem>>, vector<4x16x1xf32>
    %24 = tpu.reciprocal %23 : vector<4x16x1xf32> -> vector<4x16x1xf32>
    %25 = vector.broadcast %24 : vector<4x16x1xf32> to vector<4x16x32xf32>
    %26 = arith.mulf %22, %25 : vector<4x16x32xf32>
    %27 = tpu.transpose %26, [1, 0, 2] : vector<4x16x32xf32> -> vector<16x4x32xf32>
    %28 = vector.shape_cast %27 : vector<16x4x32xf32> to vector<16x128xf32>
    %c0_26 = arith.constant 0 : index
    %c0_27 = arith.constant 0 : index
    %29 = vector.load %arg9[%c0_26, %c0_27] : memref<128x128xf32, #tpu.memory_space<vmem>>, vector<128x128xf32>
    %cst_28 = arith.constant dense<0.000000e+00> : vector<16x128xf32>
    %30 = tpu.matmul %28, %29, %cst_28 {dimension_numbers = #tpu.dot_dimension_numbers<[1], [0], [0], [1], [0, 0, 1, 1], [], []>} : vector<16x128xf32>, vector<128x128xf32>, vector<16x128xf32> -> vector<16x128xf32>
    %c0_29 = arith.constant 0 : index
    %c0_30 = arith.constant 0 : index
    %31 = vector.load %arg10[%c0_29, %c0_30] : memref<1x128xf32, #tpu.memory_space<vmem>>, vector<1x128xf32>
    %32 = vector.broadcast %31 : vector<1x128xf32> to vector<16x128xf32>
    %33 = arith.addf %30, %32 : vector<16x128xf32>
    %c0_31 = arith.constant 0 : index
    %c0_32 = arith.constant 0 : index
    %c0_33 = arith.constant 0 : index
    %34 = vector.load %arg11[%c0_31, %c0_32, %c0_33] : memref<1x16x128xf32, #tpu.memory_space<vmem>>, vector<1x16x128xf32>
    %35 = vector.shape_cast %34 : vector<1x16x128xf32> to vector<16x128xf32>
    %36 = vector.shape_cast %33 : vector<16x128xf32> to vector<1x16x128xf32>
    tpu.vector_store %arg11[%c0_31, %c0_32, %c0_33], %36 {strides = array<i32>} : memref<1x16x128xf32, #tpu.memory_space<vmem>>, vector<1x16x128xf32>,
    return
  }
  func.func @transform_0(%arg0: i32, %arg1: i32) -> (i32, i32, i32) {
    %c0_i32 = arith.constant 0 : i32
    %c0_i32_0 = arith.constant 0 : i32
    %c0_i32_1 = arith.constant 0 : i32
    return %arg0, %c0_i32, %c0_i32_0 : i32, i32, i32
  }
  func.func @transform_1(%arg0: i32, %arg1: i32) -> (i32, i32) {
    %c0_i32 = arith.constant 0 : i32
    %c0_i32_0 = arith.constant 0 : i32
    %c0_i32_1 = arith.constant 0 : i32
    return %c0_i32, %c0_i32_0 : i32, i32
  }
  func.func @transform_2(%arg0: i32, %arg1: i32) -> (i32, i32) {
    %c0_i32 = arith.constant 0 : i32
    %c0_i32_0 = arith.constant 0 : i32
    %c0_i32_1 = arith.constant 0 : i32
    return %c0_i32, %c0_i32_0 : i32, i32
  }
  func.func @transform_3(%arg0: i32, %arg1: i32) -> (i32, i32) {
    %c0_i32 = arith.constant 0 : i32
    %c0_i32_0 = arith.constant 0 : i32
    %c0_i32_1 = arith.constant 0 : i32
    return %c0_i32, %c0_i32_0 : i32, i32
  }
  func.func @transform_4(%arg0: i32, %arg1: i32) -> (i32, i32) {
    %c0_i32 = arith.constant 0 : i32
    %c0_i32_0 = arith.constant 0 : i32
    %c0_i32_1 = arith.constant 0 : i32
    return %c0_i32, %c0_i32_0 : i32, i32
  }
  func.func @transform_5(%arg0: i32, %arg1: i32) -> (i32, i32) {
    %c0_i32 = arith.constant 0 : i32
    %c0_i32_0 = arith.constant 0 : i32
    %c0_i32_1 = arith.constant 0 : i32
    return %c0_i32, %c0_i32_0 : i32, i32
  }
  func.func @transform_6(%arg0: i32, %arg1: i32) -> (i32, i32) {
    %c0_i32 = arith.constant 0 : i32
    %c0_i32_0 = arith.constant 0 : i32
    %c0_i32_1 = arith.constant 0 : i32
    return %c0_i32, %c0_i32_0 : i32, i32
  }
  func.func @transform_7(%arg0: i32, %arg1: i32) -> (i32, i32) {
    %c0_i32 = arith.constant 0 : i32
    %c0_i32_0 = arith.constant 0 : i32
    %c0_i32_1 = arith.constant 0 : i32
    return %c0_i32, %c0_i32_0 : i32, i32
  }
  func.func @transform_8(%arg0: i32, %arg1: i32) -> (i32, i32) {
    %c0_i32 = arith.constant 0 : i32
    %c0_i32_0 = arith.constant 0 : i32
    %c0_i32_1 = arith.constant 0 : i32
    return %c0_i32, %c0_i32_0 : i32, i32
  }
  func.func @transform_9(%arg0: i32, %arg1: i32) -> (i32, i32, i32) {
    %c0_i32 = arith.constant 0 : i32
    %c0_i32_0 = arith.constant 0 : i32
    return %arg0, %arg1, %c0_i32 : i32, i32, i32
  }
}

</mosaic_0001>

<llo_original>
// kernel: tpu_custom_call.1
$region0: #{tpu_custom_call.1}
  #allocation0 [shape = 'u32[]', space=smem, size = 0x4, offset = 0x4, fixed_abs, tag = 'smem constant byte address 0x4 - core index']
  #allocation1 [shape = 'u32[72,128]{1,0:T(1,128)}', space=vmem, size = 0x9000, scoped, tag = 'internal scratch']
  #allocation2 [shape = 'f32[4,32,32]{2,1,0:T(8,128)}', space=vmem, size = 0x10000, scoped, tag = 'scratch operand']
  #allocation3 [shape = 'f32[4,32,32]{2,1,0:T(8,128)}', space=vmem, size = 0x10000, scoped, tag = 'scratch operand']
  #allocation4 [shape = 'f32[4,16,1]{2,1,0:T(8,128)}', space=vmem, size = 0x8000, scoped, tag = 'scratch operand']
  #allocation5 [shape = 'f32[4,16,1]{2,1,0:T(8,128)}', space=vmem, size = 0x8000, scoped, tag = 'scratch operand']
  #allocation6 [shape = 'f32[4,16,32]{2,1,0:T(8,128)}', space=vmem, size = 0x8000, scoped, tag = 'scratch operand']
  %s0 = inlined_call_operand.hbm [shape: f32[2,32,128], index: 0, kind: input, shape index: {}]
  %s1 = inlined_call_operand.hbm [shape: f32[128,128], index: 1, kind: input, shape index: {}]
  %s2 = inlined_call_operand.vmem [shape: f32[1,128], index: 2, kind: input, shape index: {}]
  %s3 = inlined_call_operand.hbm [shape: f32[128,128], index: 3, kind: input, shape index: {}]
  %s4 = inlined_call_operand.vmem [shape: f32[1,128], index: 4, kind: input, shape index: {}]
  %s5 = inlined_call_operand.hbm [shape: f32[128,128], index: 5, kind: input, shape index: {}]
  %s6 = inlined_call_operand.vmem [shape: f32[1,128], index: 6, kind: input, shape index: {}]
  %s7 = inlined_call_operand.hbm [shape: f32[128,128], index: 7, kind: input, shape index: {}]
  %s8 = inlined_call_operand.vmem [shape: f32[1,128], index: 8, kind: input, shape index: {}]
  %s9 = inlined_call_operand.hbm [shape: f32[2,32,128], index: 9, kind: output, shape index: {}]
  %s10 = sld [smem:[#allocation0]]
  $region100: #{tpu_custom_call.1} parent=0
    _
  %s12 = ssub.s32 1, %s10
  %s13 = scalar_select 0, %s12, %s10
  $region1: #{tpu_custom_call.1} parent=0
    #allocation7 [shape = 'u8[16384]{0}', space=vmem, size = 0x4000, scoped, tag = 'input window, operand 0, single buffered']
    #allocation8 [shape = 's32[2]{0}', space=sflag, size = 0x8, scoped, tag = 'scoped memory for tpu_custom_call.1']
    #allocation9 [shape = 's32[2]{0}', space=sflag, size = 0x8, scoped, tag = 'scoped memory for tpu_custom_call.1']
    #allocation10 [shape = 'u8[65536]{0}', space=vmem, size = 0x10000, scoped, tag = 'input window, operand 1, single buffered']
    #allocation11 [shape = 's32[1]{0}', space=sflag, size = 0x4, scoped, tag = 'scoped memory for tpu_custom_call.1']
    #allocation12 [shape = 'u8[65536]{0}', space=vmem, size = 0x10000, scoped, tag = 'input window, operand 3, single buffered']
    #allocation13 [shape = 'u8[65536]{0}', space=vmem, size = 0x10000, scoped, tag = 'input window, operand 5, single buffered']
    #allocation14 [shape = 's32[1]{0}', space=sflag, size = 0x4, scoped, tag = 'scoped memory for tpu_custom_call.1']
    #allocation15 [shape = 'u8[65536]{0}', space=vmem, size = 0x10000, scoped, tag = 'input window, operand 7, single buffered']
    #allocation16 [shape = 'u8[16384]{0}', space=vmem, size = 0x4000, scoped, tag = 'output window, operand 0']
    %14 = vsyncpa [#allocation8], 0
    %15 = vsyncpa [#allocation11], 0
    %16 = vsyncpa [#allocation14], 0
    %17 = vsyncpa [#allocation9], 0
    %s18 = scalar_lea.sflag [#allocation9], 1
    %19 = vsyncpa %s18, 0
    loop: start=0, step=1, limit=6
    $region2: #{tpu_custom_call.1} parent=1 // loop_pre_header
      _
    $region3: #{tpu_custom_call.1} parent=1 // loop_header
      %s21 = sphi 0, %s25
      %p22 = scmp.ge.s32.totalorder %s21, 6
      %s28 = sphi 0, %s40
      %s29 = sphi 0, %s36
      %s30 = sphi 0, %s28
      %s31 = sphi 0, %s29
      %s32 = sphi 0, %s30
      %s33 = sphi 0, %s31
      %s43 = sphi 0, %s45
      %s46 = sphi 0, %s43
      %s47 = sphi 0, %s46
      %s63 = sphi 0, %s47
      %s67 = sphi 0, %s67
      %s69 = sphi 0, %s67
      %s70 = sphi 0, %s69
      %s84 = sphi 0, %s70
      %s88 = sphi 0, %s88
      %s90 = sphi 0, %s88
      %s91 = sphi 0, %s90
      %s105 = sphi 0, %s91
      %s109 = sphi 0, %s109
      %s111 = sphi 0, %s109
      %s112 = sphi 0, %s111
      %s126 = sphi 0, %s112
      %s130 = sphi 0, %s130
      %s132 = sphi 0, %s130
      %s133 = sphi 0, %s132
      %s147 = sphi 0, %s133
      %s151 = sphi 0, %s151
      %s153 = sphi 0, %s151
      %s154 = sphi 0, %s153
      %s168 = sphi 0, %s154
      %s172 = sphi 0, %s172
      %s174 = sphi 0, %s172
      %s175 = sphi 0, %s174
      %s189 = sphi 0, %s175
      %s193 = sphi 0, %s193
      %s195 = sphi 0, %s193
      %s196 = sphi 0, %s195
      %s210 = sphi 0, %s196
      %s214 = sphi 0, %s214
      %s216 = sphi 0, %s214
      %s217 = sphi 0, %s216
      %s231 = sphi 0, %s217
      %s239 = sphi 0, %s241
      %s242 = sphi 0, %s239
      %s243 = sphi 0, %s242
      %s259 = sphi 0, %s243
    $region4: #{tpu_custom_call.1} parent=1 // loop_header_branch
      %24 = sbr.rel (%p22) target = $region8
    $region5: #{tpu_custom_call.1} parent=1 // loop_body
      %s26 = ssub.s32 %s21, 1
      %s27 = ssub.s32 %s21, 2
      %s34 = sadd.s32 1, %s29
      %p35 = scmp.ge.s32.totalorder %s34, 2
      %s36 = scalar_select %p35, 0, %s34
      %s37 = sadd.s32 1, %s28
      %s38 = scalar_select %p35, %s37, %s28
      %p39 = scmp.ge.s32.totalorder %s38, 2
      %s40 = scalar_select %p39, 0, %s38
      %s41 = ssub.s32 %s28, %s40
      %p42 = scmp.eq.s32.totalorder %s41, 0
      %s44 = sadd.s32 %s43, 1
      %s45 = scalar_select %p42, %s43, %s44
      %p48 = pneg %p42
      %p49 = scmp.eq.s32.totalorder %s21, 3
      %p50 = por %p48, %p49
      %p51 = scmp.ne.s32.totalorder %s43, %s46
      %p52 = scmp.eq.s32.totalorder %s21, 0
      %p53 = por %p51, %p52
      %p54 = scmp.ne.s32.totalorder %s43, %s46
      %p55 = scmp.eq.s32.totalorder %s26, 3
      %p56 = por %p54, %p55
      %p57 = scmp.ne.s32.totalorder %s46, %s47
      %p58 = scmp.eq.s32.totalorder %s26, 0
      %p59 = por %p57, %p58
      %p60 = scmp.ne.s32.totalorder %s46, %s47
      %p61 = scmp.eq.s32.totalorder %s27, 3
      %p62 = por %p60, %p61
      %p64 = scmp.ne.s32.totalorder %s47, %s63
      %p65 = scmp.eq.s32.totalorder %s27, 0
      %p66 = por %p64, %p65
      %s68 = sadd.s32 %s67, 1
      %p71 = scmp.eq.s32.totalorder %s21, 3
      %p72 = scmp.ne.s32.totalorder %s67, %s69
      %p73 = scmp.eq.s32.totalorder %s21, 0
      %p74 = por %p72, %p73
      %p75 = scmp.ne.s32.totalorder %s67, %s69
      %p76 = scmp.eq.s32.totalorder %s26, 3
      %p77 = por %p75, %p76
      %p78 = scmp.ne.s32.totalorder %s69, %s70
      %p79 = scmp.eq.s32.totalorder %s26, 0
      %p80 = por %p78, %p79
      %p81 = scmp.ne.s32.totalorder %s69, %s70
      %p82 = scmp.eq.s32.totalorder %s27, 3
      %p83 = por %p81, %p82
      %p85 = scmp.ne.s32.totalorder %s70, %s84
      %p86 = scmp.eq.s32.totalorder %s27, 0
      %p87 = por %p85, %p86
      %s89 = sadd.s32 %s88, 1
      %p92 = scmp.eq.s32.totalorder %s21, 3
      %p93 = scmp.ne.s32.totalorder %s88, %s90
      %p94 = scmp.eq.s32.totalorder %s21, 0
      %p95 = por %p93, %p94
      %p96 = scmp.ne.s32.totalorder %s88, %s90
      %p97 = scmp.eq.s32.totalorder %s26, 3
      %p98 = por %p96, %p97
      %p99 = scmp.ne.s32.totalorder %s90, %s91
      %p100 = scmp.eq.s32.totalorder %s26, 0
      %p101 = por %p99, %p100
      %p102 = scmp.ne.s32.totalorder %s90, %s91
      %p103 = scmp.eq.s32.totalorder %s27, 3
      %p104 = por %p102, %p103
      %p106 = scmp.ne.s32.totalorder %s91, %s105
      %p107 = scmp.eq.s32.totalorder %s27, 0
      %p108 = por %p106, %p107
      %s110 = sadd.s32 %s109, 1
      %p113 = scmp.eq.s32.totalorder %s21, 3
      %p114 = scmp.ne.s32.totalorder %s109, %s111
      %p115 = scmp.eq.s32.totalorder %s21, 0
      %p116 = por %p114, %p115
      %p117 = scmp.ne.s32.totalorder %s109, %s111
      %p118 = scmp.eq.s32.totalorder %s26, 3
      %p119 = por %p117, %p118
      %p120 = scmp.ne.s32.totalorder %s111, %s112
      %p121 = scmp.eq.s32.totalorder %s26, 0
      %p122 = por %p120, %p121
      %p123 = scmp.ne.s32.totalorder %s111, %s112
      %p124 = scmp.eq.s32.totalorder %s27, 3
      %p125 = por %p123, %p124
      %p127 = scmp.ne.s32.totalorder %s112, %s126
      %p128 = scmp.eq.s32.totalorder %s27, 0
      %p129 = por %p127, %p128
      %s131 = sadd.s32 %s130, 1
      %p134 = scmp.eq.s32.totalorder %s21, 3
      %p135 = scmp.ne.s32.totalorder %s130, %s132
      %p136 = scmp.eq.s32.totalorder %s21, 0
      %p137 = por %p135, %p136
      %p138 = scmp.ne.s32.totalorder %s130, %s132
      %p139 = scmp.eq.s32.totalorder %s26, 3
      %p140 = por %p138, %p139
      %p141 = scmp.ne.s32.totalorder %s132, %s133
      %p142 = scmp.eq.s32.totalorder %s26, 0
      %p143 = por %p141, %p142
      %p144 = scmp.ne.s32.totalorder %s132, %s133
      %p145 = scmp.eq.s32.totalorder %s27, 3
      %p146 = por %p144, %p145
      %p148 = scmp.ne.s32.totalorder %s133, %s147
      %p149 = scmp.eq.s32.totalorder %s27, 0
      %p150 = por %p148, %p149
      %s152 = sadd.s32 %s151, 1
      %p155 = scmp.eq.s32.totalorder %s21, 3
      %p156 = scmp.ne.s32.totalorder %s151, %s153
      %p157 = scmp.eq.s32.totalorder %s21, 0
      %p158 = por %p156, %p157
      %p159 = scmp.ne.s32.totalorder %s151, %s153
      %p160 = scmp.eq.s32.totalorder %s26, 3
      %p161 = por %p159, %p160
      %p162 = scmp.ne.s32.totalorder %s153, %s154
      %p163 = scmp.eq.s32.totalorder %s26, 0
      %p164 = por %p162, %p163
      %p165 = scmp.ne.s32.totalorder %s153, %s154
      %p166 = scmp.eq.s32.totalorder %s27, 3
      %p167 = por %p165, %p166
      %p169 = scmp.ne.s32.totalorder %s154, %s168
      %p170 = scmp.eq.s32.totalorder %s27, 0
      %p171 = por %p169, %p170
      %s173 = sadd.s32 %s172, 1
      %p176 = scmp.eq.s32.totalorder %s21, 3
      %p177 = scmp.ne.s32.totalorder %s172, %s174
      %p178 = scmp.eq.s32.totalorder %s21, 0
      %p179 = por %p177, %p178
      %p180 = scmp.ne.s32.totalorder %s172, %s174
      %p181 = scmp.eq.s32.totalorder %s26, 3
      %p182 = por %p180, %p181
      %p183 = scmp.ne.s32.totalorder %s174, %s175
      %p184 = scmp.eq.s32.totalorder %s26, 0
      %p185 = por %p183, %p184
      %p186 = scmp.ne.s32.totalorder %s174, %s175
      %p187 = scmp.eq.s32.totalorder %s27, 3
      %p188 = por %p186, %p187
      %p190 = scmp.ne.s32.totalorder %s175, %s189
      %p191 = scmp.eq.s32.totalorder %s27, 0
      %p192 = por %p190, %p191
      %s194 = sadd.s32 %s193, 1
      %p197 = scmp.eq.s32.totalorder %s21, 3
      %p198 = scmp.ne.s32.totalorder %s193, %s195
      %p199 = scmp.eq.s32.totalorder %s21, 0
      %p200 = por %p198, %p199
      %p201 = scmp.ne.s32.totalorder %s193, %s195
      %p202 = scmp.eq.s32.totalorder %s26, 3
      %p203 = por %p201, %p202
      %p204 = scmp.ne.s32.totalorder %s195, %s196
      %p205 = scmp.eq.s32.totalorder %s26, 0
      %p206 = por %p204, %p205
      %p207 = scmp.ne.s32.totalorder %s195, %s196
      %p208 = scmp.eq.s32.totalorder %s27, 3
      %p209 = por %p207, %p208
      %p211 = scmp.ne.s32.totalorder %s196, %s210
      %p212 = scmp.eq.s32.totalorder %s27, 0
      %p213 = por %p211, %p212
      %s215 = sadd.s32 %s214, 1
      %p218 = scmp.eq.s32.totalorder %s21, 3
      %p219 = scmp.ne.s32.totalorder %s214, %s216
      %p220 = scmp.eq.s32.totalorder %s21, 0
      %p221 = por %p219, %p220
      %p222 = scmp.ne.s32.totalorder %s214, %s216
      %p223 = scmp.eq.s32.totalorder %s26, 3
      %p224 = por %p222, %p223
      %p225 = scmp.ne.s32.totalorder %s216, %s217
      %p226 = scmp.eq.s32.totalorder %s26, 0
      %p227 = por %p225, %p226
      %p228 = scmp.ne.s32.totalorder %s216, %s217
      %p229 = scmp.eq.s32.totalorder %s27, 3
      %p230 = por %p228, %p229
      %p232 = scmp.ne.s32.totalorder %s217, %s231
      %p233 = scmp.eq.s32.totalorder %s27, 0
      %p234 = por %p232, %p233
      %s235 = ssub.s32 %s28, %s40
      %s236 = ssub.s32 %s29, %s36
      %s237 = sor.u32 %s235, %s236
      %p238 = scmp.eq.s32.totalorder %s237, 0
      %s240 = sadd.s32 %s239, 1
      %s241 = scalar_select %p238, %s239, %s240
      %p244 = pneg %p238
      %p245 = scmp.eq.s32.totalorder %s21, 3
      %p246 = por %p244, %p245
      %p247 = scmp.ne.s32.totalorder %s239, %s242
      %p248 = scmp.eq.s32.totalorder %s21, 0
      %p249 = por %p247, %p248
      %p250 = scmp.ne.s32.totalorder %s239, %s242
      %p251 = scmp.eq.s32.totalorder %s26, 3
      %p252 = por %p250, %p251
      %p253 = scmp.ne.s32.totalorder %s242, %s243
      %p254 = scmp.eq.s32.totalorder %s26, 0
      %p255 = por %p253, %p254
      %p256 = scmp.ne.s32.totalorder %s242, %s243
      %p257 = scmp.eq.s32.totalorder %s27, 3
      %p258 = por %p256, %p257
      %p260 = scmp.ne.s32.totalorder %s243, %s259
      %p261 = scmp.eq.s32.totalorder %s27, 0
      %p262 = por %p260, %p261
      %p263 = scmp.le.s32.totalorder 1, %s21
      %p264 = scmp.lt.s32.totalorder %s21, 5
      %p265 = pnand %p263, %p264
      %p266 = pneg %p265
      // Predicated region
      $region9: #{tpu_custom_call.1} parent=5 // pred_check
        _
      $region10: #{tpu_custom_call.1} parent=5 // pred_check_branch
        %268 = sbr.rel (%p265) target = $region12
      $region11: #{tpu_custom_call.1} parent=5 // pred_region
        %s269 = ssub.s32 %s21, 1
        // Predicated region
        $region13: #{tpu_custom_call.1} parent=11 // pred_check
          %p270 = pneg %p59
        $region14: #{tpu_custom_call.1} parent=11 // pred_check_branch
          %272 = sbr.rel (%p270) target = $region16
        $region15: #{tpu_custom_call.1} parent=11 // pred_region
          %274 = vsyncadd [#allocation8], 0
          %s275 = smul.addr %s30, 4
          %s276 = smul.addr %s275, 8
          %s277 = scalar_lea.hbm %s0, %s276
          %s278 = sshll.u32 %s277, 4
          %s279 = int_to_ptr.hbm [resolvable:$true] %s278
          %s280 = sshll.u32 [#allocation7], 4
          %s281 = int_to_ptr.vmem [resolvable:$true] %s280
          %286 = dma.hbm_to_vmem [thread:$0]  %s279, 512, %s281, [#allocation8], 128, 128, 8
        $region16: #{tpu_custom_call.1} parent=11 // pred_fallthru
          _
        // Predicated region
        $region17: #{tpu_custom_call.1} parent=11 // pred_check
          %p287 = pneg %p80
        $region18: #{tpu_custom_call.1} parent=11 // pred_check_branch
          %289 = sbr.rel (%p287) target = $region20
        $region19: #{tpu_custom_call.1} parent=11 // pred_region
          %291 = vsyncadd [#allocation11], 0
          %s292 = sshll.u32 %s1, 4
          %s293 = int_to_ptr.hbm [resolvable:$true] %s292
          %s294 = sshll.u32 [#allocation10], 4
          %s295 = int_to_ptr.vmem [resolvable:$true] %s294
          %300 = dma.hbm_to_vmem [thread:$0]  %s293, 2048, %s295, [#allocation11], 128, 128, 8
        $region20: #{tpu_custom_call.1} parent=11 // pred_fallthru
          _
        // Predicated region
        $region21: #{tpu_custom_call.1} parent=11 // pred_check
          %p301 = pneg %p101
        $region22: #{tpu_custom_call.1} parent=11 // pred_check_branch
          %303 = sbr.rel (%p301) target = $region24
        $region23: #{tpu_custom_call.1} parent=11 // pred_region
          _
        $region24: #{tpu_custom_call.1} parent=11 // pred_fallthru
          _
        // Predicated region
        $region25: #{tpu_custom_call.1} parent=11 // pred_check
          %p304 = pneg %p122
        $region26: #{tpu_custom_call.1} parent=11 // pred_check_branch
          %306 = sbr.rel (%p304) target = $region28
        $region27: #{tpu_custom_call.1} parent=11 // pred_region
          %308 = vsyncadd [#allocation11], 0
          %s309 = sshll.u32 %s3, 4
          %s310 = int_to_ptr.hbm [resolvable:$true] %s309
          %s311 = sshll.u32 [#allocation12], 4
          %s312 = int_to_ptr.vmem [resolvable:$true] %s311
          %317 = dma.hbm_to_vmem [thread:$0]  %s310, 2048, %s312, [#allocation11], 128, 128, 8
        $region28: #{tpu_custom_call.1} parent=11 // pred_fallthru
          _
        // Predicated region
        $region29: #{tpu_custom_call.1} parent=11 // pred_check
          %p318 = pneg %p143
        $region30: #{tpu_custom_call.1} parent=11 // pred_check_branch
          %320 = sbr.rel (%p318) target = $region32
        $region31: #{tpu_custom_call.1} parent=11 // pred_region
          _
        $region32: #{tpu_custom_call.1} parent=11 // pred_fallthru
          _
        // Predicated region
        $region33: #{tpu_custom_call.1} parent=11 // pred_check
          %p321 = pneg %p164
        $region34: #{tpu_custom_call.1} parent=11 // pred_check_branch
          %323 = sbr.rel (%p321) target = $region36
        $region35: #{tpu_custom_call.1} parent=11 // pred_region
          %325 = vsyncadd [#allocation14], 0
          %s326 = sshll.u32 %s5, 4
          %s327 = int_to_ptr.hbm [resolvable:$true] %s326
          %s328 = sshll.u32 [#allocation13], 4
          %s329 = int_to_ptr.vmem [resolvable:$true] %s328
          %334 = dma.hbm_to_vmem [thread:$0]  %s327, 2048, %s329, [#allocation14], 128, 128, 8
        $region36: #{tpu_custom_call.1} parent=11 // pred_fallthru
          _
        // Predicated region
        $region37: #{tpu_custom_call.1} parent=11 // pred_check
          %p335 = pneg %p185
        $region38: #{tpu_custom_call.1} parent=11 // pred_check_branch
          %337 = sbr.rel (%p335) target = $region40
        $region39: #{tpu_custom_call.1} parent=11 // pred_region
          _
        $region40: #{tpu_custom_call.1} parent=11 // pred_fallthru
          _
        // Predicated region
        $region41: #{tpu_custom_call.1} parent=11 // pred_check
          %p338 = pneg %p206
        $region42: #{tpu_custom_call.1} parent=11 // pred_check_branch
          %340 = sbr.rel (%p338) target = $region44
        $region43: #{tpu_custom_call.1} parent=11 // pred_region
          %342 = vsyncadd [#allocation14], 0
          %s343 = sshll.u32 %s7, 4
          %s344 = int_to_ptr.hbm [resolvable:$true] %s343
          %s345 = sshll.u32 [#allocation15], 4
          %s346 = int_to_ptr.vmem [resolvable:$true] %s345
          %351 = dma.hbm_to_vmem [thread:$0]  %s344, 2048, %s346, [#allocation14], 128, 128, 8
        $region44: #{tpu_custom_call.1} parent=11 // pred_fallthru
          _
        // Predicated region
        $region45: #{tpu_custom_call.1} parent=11 // pred_check
          %p352 = pneg %p227
        $region46: #{tpu_custom_call.1} parent=11 // pred_check_branch
          %354 = sbr.rel (%p352) target = $region48
        $region47: #{tpu_custom_call.1} parent=11 // pred_region
          _
        $region48: #{tpu_custom_call.1} parent=11 // pred_fallthru
          _
      $region12: #{tpu_custom_call.1} parent=5 // pred_fallthru
        _
      %p355 = scmp.lt.s32.totalorder %s21, 4
      // Predicated region
      $region49: #{tpu_custom_call.1} parent=5 // pred_check
        %p356 = pneg %p355
      $region50: #{tpu_custom_call.1} parent=5 // pred_check_branch
        %358 = sbr.rel (%p356) target = $region52
      $region51: #{tpu_custom_call.1} parent=5 // pred_region
        _
      $region52: #{tpu_custom_call.1} parent=5 // pred_fallthru
        _
      %p359 = scmp.le.s32.totalorder 1, %s21
      %p360 = scmp.lt.s32.totalorder %s21, 5
      %p361 = pnand %p359, %p360
      %p362 = pneg %p361
      // Predicated region
      $region53: #{tpu_custom_call.1} parent=5 // pred_check
        _
      $region54: #{tpu_custom_call.1} parent=5 // pred_check_branch
        %364 = sbr.rel (%p361) target = $region56
      $region55: #{tpu_custom_call.1} parent=5 // pred_region
        %s365 = ssub.s32 %s21, 1
        // Predicated region
        $region57: #{tpu_custom_call.1} parent=55 // pred_check
          %p366 = pneg %p59
        $region58: #{tpu_custom_call.1} parent=55 // pred_check_branch
          %368 = sbr.rel (%p366) target = $region60
        $region59: #{tpu_custom_call.1} parent=55 // pred_region
          %370 = dma.done [#allocation8], 512
        $region60: #{tpu_custom_call.1} parent=55 // pred_fallthru
          _
        // Predicated region
        $region61: #{tpu_custom_call.1} parent=55 // pred_check
          %p371 = pneg %p80
        $region62: #{tpu_custom_call.1} parent=55 // pred_check_branch
          %373 = sbr.rel (%p371) target = $region64
        $region63: #{tpu_custom_call.1} parent=55 // pred_region
          %375 = dma.done [#allocation11], 2048
        $region64: #{tpu_custom_call.1} parent=55 // pred_fallthru
          _
        // Predicated region
        $region65: #{tpu_custom_call.1} parent=55 // pred_check
          %p376 = pneg %p122
        $region66: #{tpu_custom_call.1} parent=55 // pred_check_branch
          %378 = sbr.rel (%p376) target = $region68
        $region67: #{tpu_custom_call.1} parent=55 // pred_region
          %380 = dma.done [#allocation11], 2048
        $region68: #{tpu_custom_call.1} parent=55 // pred_fallthru
          _
        // Predicated region
        $region69: #{tpu_custom_call.1} parent=55 // pred_check
          %p381 = pneg %p164
        $region70: #{tpu_custom_call.1} parent=55 // pred_check_branch
          %383 = sbr.rel (%p381) target = $region72
        $region71: #{tpu_custom_call.1} parent=55 // pred_region
          %385 = dma.done [#allocation14], 2048
        $region72: #{tpu_custom_call.1} parent=55 // pred_fallthru
          _
        // Predicated region
        $region73: #{tpu_custom_call.1} parent=55 // pred_check
          %p386 = pneg %p206
        $region74: #{tpu_custom_call.1} parent=55 // pred_check_branch
          %388 = sbr.rel (%p386) target = $region76
        $region75: #{tpu_custom_call.1} parent=55 // pred_region
          %390 = dma.done [#allocation14], 2048
        $region76: #{tpu_custom_call.1} parent=55 // pred_fallthru
          _
        %p391 = pneg %p59
        %p392 = pneg %p56
        %p393 = pneg %p80
        %p394 = pneg %p77
        %p395 = pneg %p101
        %p396 = pneg %p98
        %p397 = pneg %p122
        %p398 = pneg %p119
        %p399 = pneg %p143
        %p400 = pneg %p140
        %p401 = pneg %p164
        %p402 = pneg %p161
        %p403 = pneg %p185
        %p404 = pneg %p182
        %p405 = pneg %p206
        %p406 = pneg %p203
        %p407 = pneg %p227
        %p408 = pneg %p224
        %p409 = pneg %p255
        %p410 = pneg %p252
        %s411 = sand.u32 %s242, 1
        %s412 = scalar_lea.sflag [#allocation9], %s411
        %s413 = sand.u32 %s242, 1
        %s414 = smul.addr %s413, 16
        %s415 = scalar_lea.vmem [#allocation16], %s414
        %s416 = smul.u32 2, %s31
        %p417 = scmp.eq.s32.totalorder %s31, 0
        // Predicated region
        $region77: #{tpu_custom_call.1} parent=55 // pred_check
          %p418 = pneg %p417
        $region78: #{tpu_custom_call.1} parent=55 // pred_check_branch
          %420 = sbr.rel (%p418) target = $region80
        $region79: #{tpu_custom_call.1} parent=55 // pred_region
          %v421 = vld [vmem:[#allocation7] sm:$0xff]
          %v422 = vld [vmem:[#allocation7 + $0x8] sm:$0xff]
          %v423 = vld [vmem:[#allocation7 + $0x10] sm:$0xff]
          %v424 = vld [vmem:[#allocation7 + $0x18] sm:$0xff]
          %v425 = vld [vmem:[#allocation12] sm:$0xff]
          %v426 = vld [vmem:[#allocation12 + $0x8] sm:$0xff]
          %v427 = vld [vmem:[#allocation12 + $0x10] sm:$0xff]
          %v428 = vld [vmem:[#allocation12 + $0x18] sm:$0xff]
          %v429 = vld [vmem:[#allocation12 + $0x20] sm:$0xff]
          %v430 = vld [vmem:[#allocation12 + $0x28] sm:$0xff]
          %v431 = vld [vmem:[#allocation12 + $0x30] sm:$0xff]
          %v432 = vld [vmem:[#allocation12 + $0x38] sm:$0xff]
          %v433 = vld [vmem:[#allocation12 + $0x40] sm:$0xff]
          %v434 = vld [vmem:[#allocation12 + $0x48] sm:$0xff]
          %v435 = vld [vmem:[#allocation12 + $0x50] sm:$0xff]
          %v436 = vld [vmem:[#allocation12 + $0x58] sm:$0xff]
          %v437 = vld [vmem:[#allocation12 + $0x60] sm:$0xff]
          %v438 = vld [vmem:[#allocation12 + $0x68] sm:$0xff]
          %v439 = vld [vmem:[#allocation12 + $0x70] sm:$0xff]
          %v440 = vld [vmem:[#allocation12 + $0x78] sm:$0xff]
          %v441 = vld [vmem:[%s4] sm:$0x1]
          %v443 = vperm.slane %v441, 0
          %445 = vmatpush.msra.mxu0 %v440
          %446 = vmatpush.msra.mxu0 %v439
          %447 = vmatpush.msra.mxu0 %v438
          %448 = vmatpush.msra.mxu0 %v437
          %449 = vmatpush.msra.mxu0 %v436
          %450 = vmatpush.msra.mxu0 %v435
          %451 = vmatpush.msra.mxu0 %v434
          %452 = vmatpush.msra.mxu0 %v433
          %453 = vmatpush.msra.mxu0 %v432
          %454 = vmatpush.msra.mxu0 %v431
          %455 = vmatpush.msra.mxu0 %v430
          %456 = vmatpush.msra.mxu0 %v429
          %457 = vmatpush.msra.mxu0 %v428
          %458 = vmatpush.msra.mxu0 %v427
          %459 = vmatpush.msra.mxu0 %v426
          %460 = vmatpush.msra.mxu0 %v425
          %461 = vmatmul.f32.gmra.mxu0 %v421
          %v462 = vpop.f32.mrf.mxu0
          %v463 = vadd.f32 %v443, %v462
          %464 = vmatmul.f32.gmra.mxu0 %v422
          %v465 = vpop.f32.mrf.mxu0
          %v466 = vadd.f32 %v443, %v465
          %467 = vmatmul.f32.gmra.mxu0 %v423
          %v468 = vpop.f32.mrf.mxu0
          %v469 = vadd.f32 %v443, %v468
          %470 = vmatmul.f32.gmra.mxu0 %v424
          %v471 = vpop.f32.mrf.mxu0
          %v472 = vadd.f32 %v443, %v471
          %473 = vdwg.mxu0
          %v474 = vld [vmem:[#allocation13] sm:$0xff]
          %v475 = vld [vmem:[#allocation13 + $0x8] sm:$0xff]
          %v476 = vld [vmem:[#allocation13 + $0x10] sm:$0xff]
          %v477 = vld [vmem:[#allocation13 + $0x18] sm:$0xff]
          %v478 = vld [vmem:[#allocation13 + $0x20] sm:$0xff]
          %v479 = vld [vmem:[#allocation13 + $0x28] sm:$0xff]
          %v480 = vld [vmem:[#allocation13 + $0x30] sm:$0xff]
          %v481 = vld [vmem:[#allocation13 + $0x38] sm:$0xff]
          %v482 = vld [vmem:[#allocation13 + $0x40] sm:$0xff]
          %v483 = vld [vmem:[#allocation13 + $0x48] sm:$0xff]
          %v484 = vld [vmem:[#allocation13 + $0x50] sm:$0xff]
          %v485 = vld [vmem:[#allocation13 + $0x58] sm:$0xff]
          %v486 = vld [vmem:[#allocation13 + $0x60] sm:$0xff]
          %v487 = vld [vmem:[#allocation13 + $0x68] sm:$0xff]
          %v488 = vld [vmem:[#allocation13 + $0x70] sm:$0xff]
          %v489 = vld [vmem:[#allocation13 + $0x78] sm:$0xff]
          %v490 = vld [vmem:[%s6] sm:$0x1]
          %v492 = vperm.slane %v490, 0
          %494 = vmatpush.msra.mxu0 %v489
          %495 = vmatpush.msra.mxu0 %v488
          %496 = vmatpush.msra.mxu0 %v487
          %497 = vmatpush.msra.mxu0 %v486
          %498 = vmatpush.msra.mxu0 %v485
          %499 = vmatpush.msra.mxu0 %v484
          %500 = vmatpush.msra.mxu0 %v483
          %501 = vmatpush.msra.mxu0 %v482
          %502 = vmatpush.msra.mxu0 %v481
          %503 = vmatpush.msra.mxu0 %v480
          %504 = vmatpush.msra.mxu0 %v479
          %505 = vmatpush.msra.mxu0 %v478
          %506 = vmatpush.msra.mxu0 %v477
          %507 = vmatpush.msra.mxu0 %v476
          %508 = vmatpush.msra.mxu0 %v475
          %509 = vmatpush.msra.mxu0 %v474
          %510 = vmatmul.f32.gmra.mxu0 %v421
          %v511 = vpop.f32.mrf.mxu0
          %v512 = vadd.f32 %v492, %v511
          %513 = vmatmul.f32.gmra.mxu0 %v422
          %v514 = vpop.f32.mrf.mxu0
          %v515 = vadd.f32 %v492, %v514
          %516 = vmatmul.f32.gmra.mxu0 %v423
          %v517 = vpop.f32.mrf.mxu0
          %v518 = vadd.f32 %v492, %v517
          %519 = vmatmul.f32.gmra.mxu0 %v424
          %v520 = vpop.f32.mrf.mxu0
          %v521 = vadd.f32 %v492, %v520
          %522 = vdwg.mxu0
          %527 = vrot.lane.b32.xlu0 %v463, 96
          %v528 = vpop.permute.xlu0 %527
          %529 = vrot.lane.b32.xlu0 %v466, 96
          %v530 = vpop.permute.xlu0 %529
          %531 = vrot.lane.b32.xlu0 %v469, 96
          %v532 = vpop.permute.xlu0 %531
          %533 = vrot.lane.b32.xlu0 %v472, 96
          %v534 = vpop.permute.xlu0 %533
          %539 = vrot.lane.b32.xlu0 %v463, 64
          %v540 = vpop.permute.xlu0 %539
          %541 = vrot.lane.b32.xlu0 %v466, 64
          %v542 = vpop.permute.xlu0 %541
          %543 = vrot.lane.b32.xlu0 %v469, 64
          %v544 = vpop.permute.xlu0 %543
          %545 = vrot.lane.b32.xlu0 %v472, 64
          %v546 = vpop.permute.xlu0 %545
          %551 = vrot.lane.b32.xlu0 %v463, 32
          %v552 = vpop.permute.xlu0 %551
          %553 = vrot.lane.b32.xlu0 %v466, 32
          %v554 = vpop.permute.xlu0 %553
          %555 = vrot.lane.b32.xlu0 %v469, 32
          %v556 = vpop.permute.xlu0 %555
          %557 = vrot.lane.b32.xlu0 %v472, 32
          %v558 = vpop.permute.xlu0 %557
          %v563 = vrot.slane %v540, 4
          %vm564 = vcmask 1047556
          %v565 = vsel %vm564, %v563, %v463
          %v566 = vrot.slane %v463, 4
          %v567 = vsel %vm564, %v540, %v566
          %v569 = vunpack.c.l.s4 1983009808
          %v570 = vunpack.c.0.s8 %v569
          %v571 = vperm.slane %v565, %v570
          %v573 = vunpack.c.l.s4 1983009808
          %v574 = vunpack.c.0.s8 %v573
          %v575 = vperm.slane %v567, %v574
          %v576 = vrot.slane %v552, 4
          %v577 = vsel %vm564, %v576, %v528
          %v578 = vrot.slane %v528, 4
          %v579 = vsel %vm564, %v552, %v578
          %v581 = vunpack.c.l.s4 1983009808
          %v582 = vunpack.c.0.s8 %v581
          %v583 = vperm.slane %v577, %v582
          %v585 = vunpack.c.l.s4 1983009808
          %v586 = vunpack.c.0.s8 %v585
          %v587 = vperm.slane %v579, %v586
          %v588 = vrot.slane %v583, 4
          %v589 = vsel %vm564, %v588, %v571
          %v590 = vrot.slane %v571, 4
          %v591 = vsel %vm564, %v583, %v590
          %v593 = vunpack.c.l.s4 1934713408
          %v594 = vunpack.c.0.s8 %v593
          %v595 = vperm.slane %v589, %v594
          %v597 = vunpack.c.l.s4 1934713408
          %v598 = vunpack.c.0.s8 %v597
          %v599 = vperm.slane %v591, %v598
          %v600 = vrot.slane %v587, 4
          %v601 = vsel %vm564, %v600, %v575
          %v602 = vrot.slane %v575, 4
          %v603 = vsel %vm564, %v587, %v602
          %v605 = vunpack.c.l.s4 1934713408
          %v606 = vunpack.c.0.s8 %v605
          %v607 = vperm.slane %v601, %v606
          %v609 = vunpack.c.l.s4 1934713408
          %v610 = vunpack.c.0.s8 %v609
          %v611 = vperm.slane %v603, %v610
          %v612 = vrot.slane %v595, 4
          %v613 = vsel %vm564, 0.0, %v612
          %v614 = vrot.slane %v599, 4
          %v615 = vsel %vm564, 0.0, %v614
          %v616 = vrot.slane %v607, 4
          %v617 = vsel %vm564, 0.0, %v616
          %v618 = vrot.slane %v611, 4
          %v619 = vsel %vm564, 0.0, %v618
          %v620 = vrot.slane %v542, 4
          %v621 = vsel %vm564, %v620, %v466
          %v622 = vrot.slane %v466, 4
          %v623 = vsel %vm564, %v542, %v622
          %v625 = vunpack.c.l.s4 1983009808
          %v626 = vunpack.c.0.s8 %v625
          %v627 = vperm.slane %v621, %v626
          %v629 = vunpack.c.l.s4 1983009808
          %v630 = vunpack.c.0.s8 %v629
          %v631 = vperm.slane %v623, %v630
          %v632 = vrot.slane %v554, 4
          %v633 = vsel %vm564, %v632, %v530
          %v634 = vrot.slane %v530, 4
          %v635 = vsel %vm564, %v554, %v634
          %v637 = vunpack.c.l.s4 1983009808
          %v638 = vunpack.c.0.s8 %v637
          %v639 = vperm.slane %v633, %v638
          %v641 = vunpack.c.l.s4 1983009808
          %v642 = vunpack.c.0.s8 %v641
          %v643 = vperm.slane %v635, %v642
          %v644 = vrot.slane %v639, 4
          %v645 = vsel %vm564, %v644, %v627
          %v646 = vrot.slane %v627, 4
          %v647 = vsel %vm564, %v639, %v646
          %v649 = vunpack.c.l.s4 1934713408
          %v650 = vunpack.c.0.s8 %v649
          %v651 = vperm.slane %v645, %v650
          %v653 = vunpack.c.l.s4 1934713408
          %v654 = vunpack.c.0.s8 %v653
          %v655 = vperm.slane %v647, %v654
          %v656 = vrot.slane %v643, 4
          %v657 = vsel %vm564, %v656, %v631
          %v658 = vrot.slane %v631, 4
          %v659 = vsel %vm564, %v643, %v658
          %v661 = vunpack.c.l.s4 1934713408
          %v662 = vunpack.c.0.s8 %v661
          %v663 = vperm.slane %v657, %v662
          %v665 = vunpack.c.l.s4 1934713408
          %v666 = vunpack.c.0.s8 %v665
          %v667 = vperm.slane %v659, %v666
          %v668 = vrot.slane %v651, 4
          %v669 = vsel %vm564, 0.0, %v668
          %v670 = vrot.slane %v655, 4
          %v671 = vsel %vm564, 0.0, %v670
          %v672 = vrot.slane %v663, 4
          %v673 = vsel %vm564, 0.0, %v672
          %v674 = vrot.slane %v667, 4
          %v675 = vsel %vm564, 0.0, %v674
          %v676 = vrot.slane %v544, 4
          %v677 = vsel %vm564, %v676, %v469
          %v678 = vrot.slane %v469, 4
          %v679 = vsel %vm564, %v544, %v678
          %v681 = vunpack.c.l.s4 1983009808
          %v682 = vunpack.c.0.s8 %v681
          %v683 = vperm.slane %v677, %v682
          %v685 = vunpack.c.l.s4 1983009808
          %v686 = vunpack.c.0.s8 %v685
          %v687 = vperm.slane %v679, %v686
          %v688 = vrot.slane %v556, 4
          %v689 = vsel %vm564, %v688, %v532
          %v690 = vrot.slane %v532, 4
          %v691 = vsel %vm564, %v556, %v690
          %v693 = vunpack.c.l.s4 1983009808
          %v694 = vunpack.c.0.s8 %v693
          %v695 = vperm.slane %v689, %v694
          %v697 = vunpack.c.l.s4 1983009808
          %v698 = vunpack.c.0.s8 %v697
          %v699 = vperm.slane %v691, %v698
          %v700 = vrot.slane %v695, 4
          %v701 = vsel %vm564, %v700, %v683
          %v702 = vrot.slane %v683, 4
          %v703 = vsel %vm564, %v695, %v702
          %v705 = vunpack.c.l.s4 1934713408
          %v706 = vunpack.c.0.s8 %v705
          %v707 = vperm.slane %v701, %v706
          %v709 = vunpack.c.l.s4 1934713408
          %v710 = vunpack.c.0.s8 %v709
          %v711 = vperm.slane %v703, %v710
          %v712 = vrot.slane %v699, 4
          %v713 = vsel %vm564, %v712, %v687
          %v714 = vrot.slane %v687, 4
          %v715 = vsel %vm564, %v699, %v714
          %v717 = vunpack.c.l.s4 1934713408
          %v718 = vunpack.c.0.s8 %v717
          %v719 = vperm.slane %v713, %v718
          %v721 = vunpack.c.l.s4 1934713408
          %v722 = vunpack.c.0.s8 %v721
          %v723 = vperm.slane %v715, %v722
          %v724 = vrot.slane %v707, 4
          %v725 = vsel %vm564, 0.0, %v724
          %v726 = vrot.slane %v711, 4
          %v727 = vsel %vm564, 0.0, %v726
          %v728 = vrot.slane %v719, 4
          %v729 = vsel %vm564, 0.0, %v728
          %v730 = vrot.slane %v723, 4
          %v731 = vsel %vm564, 0.0, %v730
          %v732 = vrot.slane %v546, 4
          %v733 = vsel %vm564, %v732, %v472
          %v734 = vrot.slane %v472, 4
          %v735 = vsel %vm564, %v546, %v734
          %v737 = vunpack.c.l.s4 1983009808
          %v738 = vunpack.c.0.s8 %v737
          %v739 = vperm.slane %v733, %v738
          %v741 = vunpack.c.l.s4 1983009808
          %v742 = vunpack.c.0.s8 %v741
          %v743 = vperm.slane %v735, %v742
          %v744 = vrot.slane %v558, 4
          %v745 = vsel %vm564, %v744, %v534
          %v746 = vrot.slane %v534, 4
          %v747 = vsel %vm564, %v558, %v746
          %v749 = vunpack.c.l.s4 1983009808
          %v750 = vunpack.c.0.s8 %v749
          %v751 = vperm.slane %v745, %v750
          %v753 = vunpack.c.l.s4 1983009808
          %v754 = vunpack.c.0.s8 %v753
          %v755 = vperm.slane %v747, %v754
          %v756 = vrot.slane %v751, 4
          %v757 = vsel %vm564, %v756, %v739
          %v758 = vrot.slane %v739, 4
          %v759 = vsel %vm564, %v751, %v758
          %v761 = vunpack.c.l.s4 1934713408
          %v762 = vunpack.c.0.s8 %v761
          %v763 = vperm.slane %v757, %v762
          %v765 = vunpack.c.l.s4 1934713408
          %v766 = vunpack.c.0.s8 %v765
          %v767 = vperm.slane %v759, %v766
          %v768 = vrot.slane %v755, 4
          %v769 = vsel %vm564, %v768, %v743
          %v770 = vrot.slane %v743, 4
          %v771 = vsel %vm564, %v755, %v770
          %v773 = vunpack.c.l.s4 1934713408
          %v774 = vunpack.c.0.s8 %v773
          %v775 = vperm.slane %v769, %v774
          %v777 = vunpack.c.l.s4 1934713408
          %v778 = vunpack.c.0.s8 %v777
          %v779 = vperm.slane %v771, %v778
          %v780 = vrot.slane %v763, 4
          %v781 = vsel %vm564, 0.0, %v780
          %v782 = vrot.slane %v767, 4
          %v783 = vsel %vm564, 0.0, %v782
          %v784 = vrot.slane %v775, 4
          %v785 = vsel %vm564, 0.0, %v784
          %v786 = vrot.slane %v779, 4
          %v787 = vsel %vm564, 0.0, %v786
          %v788 = vsel %vm564, %v614, %v595
          %v790 = vunpack.c.l.s4 1983009808
          %v791 = vunpack.c.0.s8 %v790
          %v792 = vperm.slane %v788, %v791
          %v793 = vrot.slane %v615, 4
          %v794 = vsel %vm564, %v793, %v613
          %v796 = vunpack.c.l.s4 1983009808
          %v797 = vunpack.c.0.s8 %v796
          %v798 = vperm.slane %v794, %v797
          %v799 = vsel %vm564, %v618, %v607
          %v801 = vunpack.c.l.s4 1983009808
          %v802 = vunpack.c.0.s8 %v801
          %v803 = vperm.slane %v799, %v802
          %v804 = vrot.slane %v619, 4
          %v805 = vsel %vm564, %v804, %v617
          %v807 = vunpack.c.l.s4 1983009808
          %v808 = vunpack.c.0.s8 %v807
          %v809 = vperm.slane %v805, %v808
          %v810 = vrot.slane %v798, 4
          %v811 = vsel %vm564, %v810, %v792
          %v812 = vrot.slane %v792, 4
          %v813 = vsel %vm564, %v798, %v812
          %v815 = vunpack.c.l.s4 1934713408
          %v816 = vunpack.c.0.s8 %v815
          %v817 = vperm.slane %v811, %v816
          %v819 = vunpack.c.l.s4 1934713408
          %v820 = vunpack.c.0.s8 %v819
          %v821 = vperm.slane %v813, %v820
          %v822 = vrot.slane %v809, 4
          %v823 = vsel %vm564, %v822, %v803
          %v824 = vrot.slane %v803, 4
          %v825 = vsel %vm564, %v809, %v824
          %v827 = vunpack.c.l.s4 1934713408
          %v828 = vunpack.c.0.s8 %v827
          %v829 = vperm.slane %v823, %v828
          %v831 = vunpack.c.l.s4 1934713408
          %v832 = vunpack.c.0.s8 %v831
          %v833 = vperm.slane %v825, %v832
          %v834 = vrot.slane %v829, 4
          %v835 = vsel %vm564, %v834, %v817
          %v836 = vrot.slane %v817, 4
          %v837 = vsel %vm564, %v829, %v836
          %v838 = vrot.slane %v833, 4
          %v839 = vsel %vm564, %v838, %v821
          %v840 = vrot.slane %v821, 4
          %v841 = vsel %vm564, %v833, %v840
          %v842 = vsel %vm564, %v670, %v651
          %v844 = vunpack.c.l.s4 1983009808
          %v845 = vunpack.c.0.s8 %v844
          %v846 = vperm.slane %v842, %v845
          %v847 = vrot.slane %v671, 4
          %v848 = vsel %vm564, %v847, %v669
          %v850 = vunpack.c.l.s4 1983009808
          %v851 = vunpack.c.0.s8 %v850
          %v852 = vperm.slane %v848, %v851
          %v853 = vsel %vm564, %v674, %v663
          %v855 = vunpack.c.l.s4 1983009808
          %v856 = vunpack.c.0.s8 %v855
          %v857 = vperm.slane %v853, %v856
          %v858 = vrot.slane %v675, 4
          %v859 = vsel %vm564, %v858, %v673
          %v861 = vunpack.c.l.s4 1983009808
          %v862 = vunpack.c.0.s8 %v861
          %v863 = vperm.slane %v859, %v862
          %v864 = vrot.slane %v852, 4
          %v865 = vsel %vm564, %v864, %v846
          %v866 = vrot.slane %v846, 4
          %v867 = vsel %vm564, %v852, %v866
          %v869 = vunpack.c.l.s4 1934713408
          %v870 = vunpack.c.0.s8 %v869
          %v871 = vperm.slane %v865, %v870
          %v873 = vunpack.c.l.s4 1934713408
          %v874 = vunpack.c.0.s8 %v873
          %v875 = vperm.slane %v867, %v874
          %v876 = vrot.slane %v863, 4
          %v877 = vsel %vm564, %v876, %v857
          %v878 = vrot.slane %v857, 4
          %v879 = vsel %vm564, %v863, %v878
          %v881 = vunpack.c.l.s4 1934713408
          %v882 = vunpack.c.0.s8 %v881
          %v883 = vperm.slane %v877, %v882
          %v885 = vunpack.c.l.s4 1934713408
          %v886 = vunpack.c.0.s8 %v885
          %v887 = vperm.slane %v879, %v886
          %v888 = vrot.slane %v883, 4
          %v889 = vsel %vm564, %v888, %v871
          %v890 = vrot.slane %v871, 4
          %v891 = vsel %vm564, %v883, %v890
          %v892 = vrot.slane %v887, 4
          %v893 = vsel %vm564, %v892, %v875
          %v894 = vrot.slane %v875, 4
          %v895 = vsel %vm564, %v887, %v894
          %v896 = vsel %vm564, %v726, %v707
          %v898 = vunpack.c.l.s4 1983009808
          %v899 = vunpack.c.0.s8 %v898
          %v900 = vperm.slane %v896, %v899
          %v901 = vrot.slane %v727, 4
          %v902 = vsel %vm564, %v901, %v725
          %v904 = vunpack.c.l.s4 1983009808
          %v905 = vunpack.c.0.s8 %v904
          %v906 = vperm.slane %v902, %v905
          %v907 = vsel %vm564, %v730, %v719
          %v909 = vunpack.c.l.s4 1983009808
          %v910 = vunpack.c.0.s8 %v909
          %v911 = vperm.slane %v907, %v910
          %v912 = vrot.slane %v731, 4
          %v913 = vsel %vm564, %v912, %v729
          %v915 = vunpack.c.l.s4 1983009808
          %v916 = vunpack.c.0.s8 %v915
          %v917 = vperm.slane %v913, %v916
          %v918 = vrot.slane %v906, 4
          %v919 = vsel %vm564, %v918, %v900
          %v920 = vrot.slane %v900, 4
          %v921 = vsel %vm564, %v906, %v920
          %v923 = vunpack.c.l.s4 1934713408
          %v924 = vunpack.c.0.s8 %v923
          %v925 = vperm.slane %v919, %v924
          %v927 = vunpack.c.l.s4 1934713408
          %v928 = vunpack.c.0.s8 %v927
          %v929 = vperm.slane %v921, %v928
          %v930 = vrot.slane %v917, 4
          %v931 = vsel %vm564, %v930, %v911
          %v932 = vrot.slane %v911, 4
          %v933 = vsel %vm564, %v917, %v932
          %v935 = vunpack.c.l.s4 1934713408
          %v936 = vunpack.c.0.s8 %v935
          %v937 = vperm.slane %v931, %v936
          %v939 = vunpack.c.l.s4 1934713408
          %v940 = vunpack.c.0.s8 %v939
          %v941 = vperm.slane %v933, %v940
          %v942 = vrot.slane %v937, 4
          %v943 = vsel %vm564, %v942, %v925
          %v944 = vrot.slane %v925, 4
          %v945 = vsel %vm564, %v937, %v944
          %v946 = vrot.slane %v941, 4
          %v947 = vsel %vm564, %v946, %v929
          %v948 = vrot.slane %v929, 4
          %v949 = vsel %vm564, %v941, %v948
          %v950 = vsel %vm564, %v782, %v763
          %v952 = vunpack.c.l.s4 1983009808
          %v953 = vunpack.c.0.s8 %v952
          %v954 = vperm.slane %v950, %v953
          %v955 = vrot.slane %v783, 4
          %v956 = vsel %vm564, %v955, %v781
          %v958 = vunpack.c.l.s4 1983009808
          %v959 = vunpack.c.0.s8 %v958
          %v960 = vperm.slane %v956, %v959
          %v961 = vsel %vm564, %v786, %v775
          %v963 = vunpack.c.l.s4 1983009808
          %v964 = vunpack.c.0.s8 %v963
          %v965 = vperm.slane %v961, %v964
          %v966 = vrot.slane %v787, 4
          %v967 = vsel %vm564, %v966, %v785
          %v969 = vunpack.c.l.s4 1983009808
          %v970 = vunpack.c.0.s8 %v969
          %v971 = vperm.slane %v967, %v970
          %v972 = vrot.slane %v960, 4
          %v973 = vsel %vm564, %v972, %v954
          %v974 = vrot.slane %v954, 4
          %v975 = vsel %vm564, %v960, %v974
          %v977 = vunpack.c.l.s4 1934713408
          %v978 = vunpack.c.0.s8 %v977
          %v979 = vperm.slane %v973, %v978
          %v981 = vunpack.c.l.s4 1934713408
          %v982 = vunpack.c.0.s8 %v981
          %v983 = vperm.slane %v975, %v982
          %v984 = vrot.slane %v971, 4
          %v985 = vsel %vm564, %v984, %v965
          %v986 = vrot.slane %v965, 4
          %v987 = vsel %vm564, %v971, %v986
          %v989 = vunpack.c.l.s4 1934713408
          %v990 = vunpack.c.0.s8 %v989
          %v991 = vperm.slane %v985, %v990
          %v993 = vunpack.c.l.s4 1934713408
          %v994 = vunpack.c.0.s8 %v993
          %v995 = vperm.slane %v987, %v994
          %v996 = vrot.slane %v991, 4
          %v997 = vsel %vm564, %v996, %v979
          %v998 = vrot.slane %v979, 4
          %v999 = vsel %vm564, %v991, %v998
          %v1000 = vrot.slane %v995, 4
          %v1001 = vsel %vm564, %v1000, %v983
          %v1002 = vrot.slane %v983, 4
          %v1003 = vsel %vm564, %v995, %v1002
          %vm1004 = vcmask 261120
          %1005 = vst.msk [vmem:[#allocation2] sm:$0xff] %vm1004, %v835
          %1006 = vst.msk [vmem:[#allocation2 + $0x8] sm:$0xff] %vm1004, %v889
          %1007 = vst.msk [vmem:[#allocation2 + $0x10] sm:$0xff] %vm1004, %v943
          %1008 = vst.msk [vmem:[#allocation2 + $0x18] sm:$0xff] %vm1004, %v997
          %1009 = vst.msk [vmem:[#allocation2 + $0x20] sm:$0xff] %vm1004, %v837
          %1010 = vst.msk [vmem:[#allocation2 + $0x28] sm:$0xff] %vm1004, %v891
          %1011 = vst.msk [vmem:[#allocation2 + $0x30] sm:$0xff] %vm1004, %v945
          %1012 = vst.msk [vmem:[#allocation2 + $0x38] sm:$0xff] %vm1004, %v999
          %1013 = vst.msk [vmem:[#allocation2 + $0x40] sm:$0xff] %vm1004, %v839
          %1014 = vst.msk [vmem:[#allocation2 + $0x48] sm:$0xff] %vm1004, %v893
          %1015 = vst.msk [vmem:[#allocation2 + $0x50] sm:$0xff] %vm1004, %v947
          %1016 = vst.msk [vmem:[#allocation2 + $0x58] sm:$0xff] %vm1004, %v1001
          %1017 = vst.msk [vmem:[#allocation2 + $0x60] sm:$0xff] %vm1004, %v841
          %1018 = vst.msk [vmem:[#allocation2 + $0x68] sm:$0xff] %vm1004, %v895
          %1019 = vst.msk [vmem:[#allocation2 + $0x70] sm:$0xff] %vm1004, %v949
          %1020 = vst.msk [vmem:[#allocation2 + $0x78] sm:$0xff] %vm1004, %v1003
          %1025 = vrot.lane.b32.xlu0 %v512, 96
          %v1026 = vpop.permute.xlu0 %1025
          %1027 = vrot.lane.b32.xlu0 %v515, 96
          %v1028 = vpop.permute.xlu0 %1027
          %1029 = vrot.lane.b32.xlu0 %v518, 96
          %v1030 = vpop.permute.xlu0 %1029
          %1031 = vrot.lane.b32.xlu0 %v521, 96
          %v1032 = vpop.permute.xlu0 %1031
          %1037 = vrot.lane.b32.xlu0 %v512, 64
          %v1038 = vpop.permute.xlu0 %1037
          %1039 = vrot.lane.b32.xlu0 %v515, 64
          %v1040 = vpop.permute.xlu0 %1039
          %1041 = vrot.lane.b32.xlu0 %v518, 64
          %v1042 = vpop.permute.xlu0 %1041
          %1043 = vrot.lane.b32.xlu0 %v521, 64
          %v1044 = vpop.permute.xlu0 %1043
          %1049 = vrot.lane.b32.xlu0 %v512, 32
          %v1050 = vpop.permute.xlu0 %1049
          %1051 = vrot.lane.b32.xlu0 %v515, 32
          %v1052 = vpop.permute.xlu0 %1051
          %1053 = vrot.lane.b32.xlu0 %v518, 32
          %v1054 = vpop.permute.xlu0 %1053
          %1055 = vrot.lane.b32.xlu0 %v521, 32
          %v1056 = vpop.permute.xlu0 %1055
          %v1061 = vrot.slane %v1038, 4
          %v1062 = vsel %vm564, %v1061, %v512
          %v1063 = vrot.slane %v512, 4
          %v1064 = vsel %vm564, %v1038, %v1063
          %v1066 = vunpack.c.l.s4 1983009808
          %v1067 = vunpack.c.0.s8 %v1066
          %v1068 = vperm.slane %v1062, %v1067
          %v1070 = vunpack.c.l.s4 1983009808
          %v1071 = vunpack.c.0.s8 %v1070
          %v1072 = vperm.slane %v1064, %v1071
          %v1073 = vrot.slane %v1050, 4
          %v1074 = vsel %vm564, %v1073, %v1026
          %v1075 = vrot.slane %v1026, 4
          %v1076 = vsel %vm564, %v1050, %v1075
          %v1078 = vunpack.c.l.s4 1983009808
          %v1079 = vunpack.c.0.s8 %v1078
          %v1080 = vperm.slane %v1074, %v1079
          %v1082 = vunpack.c.l.s4 1983009808
          %v1083 = vunpack.c.0.s8 %v1082
          %v1084 = vperm.slane %v1076, %v1083
          %v1085 = vrot.slane %v1080, 4
          %v1086 = vsel %vm564, %v1085, %v1068
          %v1087 = vrot.slane %v1068, 4
          %v1088 = vsel %vm564, %v1080, %v1087
          %v1090 = vunpack.c.l.s4 1934713408
          %v1091 = vunpack.c.0.s8 %v1090
          %v1092 = vperm.slane %v1086, %v1091
          %v1094 = vunpack.c.l.s4 1934713408
          %v1095 = vunpack.c.0.s8 %v1094
          %v1096 = vperm.slane %v1088, %v1095
          %v1097 = vrot.slane %v1084, 4
          %v1098 = vsel %vm564, %v1097, %v1072
          %v1099 = vrot.slane %v1072, 4
          %v1100 = vsel %vm564, %v1084, %v1099
          %v1102 = vunpack.c.l.s4 1934713408
          %v1103 = vunpack.c.0.s8 %v1102
          %v1104 = vperm.slane %v1098, %v1103
          %v1106 = vunpack.c.l.s4 1934713408
          %v1107 = vunpack.c.0.s8 %v1106
          %v1108 = vperm.slane %v1100, %v1107
          %v1109 = vrot.slane %v1092, 4
          %v1110 = vsel %vm564, 0.0, %v1109
          %v1111 = vrot.slane %v1096, 4
          %v1112 = vsel %vm564, 0.0, %v1111
          %v1113 = vrot.slane %v1104, 4
          %v1114 = vsel %vm564, 0.0, %v1113
          %v1115 = vrot.slane %v1108, 4
          %v1116 = vsel %vm564, 0.0, %v1115
          %v1117 = vrot.slane %v1040, 4
          %v1118 = vsel %vm564, %v1117, %v515
          %v1119 = vrot.slane %v515, 4
          %v1120 = vsel %vm564, %v1040, %v1119
          %v1122 = vunpack.c.l.s4 1983009808
          %v1123 = vunpack.c.0.s8 %v1122
          %v1124 = vperm.slane %v1118, %v1123
          %v1126 = vunpack.c.l.s4 1983009808
          %v1127 = vunpack.c.0.s8 %v1126
          %v1128 = vperm.slane %v1120, %v1127
          %v1129 = vrot.slane %v1052, 4
          %v1130 = vsel %vm564, %v1129, %v1028
          %v1131 = vrot.slane %v1028, 4
          %v1132 = vsel %vm564, %v1052, %v1131
          %v1134 = vunpack.c.l.s4 1983009808
          %v1135 = vunpack.c.0.s8 %v1134
          %v1136 = vperm.slane %v1130, %v1135
          %v1138 = vunpack.c.l.s4 1983009808
          %v1139 = vunpack.c.0.s8 %v1138
          %v1140 = vperm.slane %v1132, %v1139
          %v1141 = vrot.slane %v1136, 4
          %v1142 = vsel %vm564, %v1141, %v1124
          %v1143 = vrot.slane %v1124, 4
          %v1144 = vsel %vm564, %v1136, %v1143
          %v1146 = vunpack.c.l.s4 1934713408
          %v1147 = vunpack.c.0.s8 %v1146
          %v1148 = vperm.slane %v1142, %v1147
          %v1150 = vunpack.c.l.s4 1934713408
          %v1151 = vunpack.c.0.s8 %v1150
          %v1152 = vperm.slane %v1144, %v1151
          %v1153 = vrot.slane %v1140, 4
          %v1154 = vsel %vm564, %v1153, %v1128
          %v1155 = vrot.slane %v1128, 4
          %v1156 = vsel %vm564, %v1140, %v1155
          %v1158 = vunpack.c.l.s4 1934713408
          %v1159 = vunpack.c.0.s8 %v1158
          %v1160 = vperm.slane %v1154, %v1159
          %v1162 = vunpack.c.l.s4 1934713408
          %v1163 = vunpack.c.0.s8 %v1162
          %v1164 = vperm.slane %v1156, %v1163
          %v1165 = vrot.slane %v1148, 4
          %v1166 = vsel %vm564, 0.0, %v1165
          %v1167 = vrot.slane %v1152, 4
          %v1168 = vsel %vm564, 0.0, %v1167
          %v1169 = vrot.slane %v1160, 4
          %v1170 = vsel %vm564, 0.0, %v1169
          %v1171 = vrot.slane %v1164, 4
          %v1172 = vsel %vm564, 0.0, %v1171
          %v1173 = vrot.slane %v1042, 4
          %v1174 = vsel %vm564, %v1173, %v518
          %v1175 = vrot.slane %v518, 4
          %v1176 = vsel %vm564, %v1042, %v1175
          %v1178 = vunpack.c.l.s4 1983009808
          %v1179 = vunpack.c.0.s8 %v1178
          %v1180 = vperm.slane %v1174, %v1179
          %v1182 = vunpack.c.l.s4 1983009808
          %v1183 = vunpack.c.0.s8 %v1182
          %v1184 = vperm.slane %v1176, %v1183
          %v1185 = vrot.slane %v1054, 4
          %v1186 = vsel %vm564, %v1185, %v1030
          %v1187 = vrot.slane %v1030, 4
          %v1188 = vsel %vm564, %v1054, %v1187
          %v1190 = vunpack.c.l.s4 1983009808
          %v1191 = vunpack.c.0.s8 %v1190
          %v1192 = vperm.slane %v1186, %v1191
          %v1194 = vunpack.c.l.s4 1983009808
          %v1195 = vunpack.c.0.s8 %v1194
          %v1196 = vperm.slane %v1188, %v1195
          %v1197 = vrot.slane %v1192, 4
          %v1198 = vsel %vm564, %v1197, %v1180
          %v1199 = vrot.slane %v1180, 4
          %v1200 = vsel %vm564, %v1192, %v1199
          %v1202 = vunpack.c.l.s4 1934713408
          %v1203 = vunpack.c.0.s8 %v1202
          %v1204 = vperm.slane %v1198, %v1203
          %v1206 = vunpack.c.l.s4 1934713408
          %v1207 = vunpack.c.0.s8 %v1206
          %v1208 = vperm.slane %v1200, %v1207
          %v1209 = vrot.slane %v1196, 4
          %v1210 = vsel %vm564, %v1209, %v1184
          %v1211 = vrot.slane %v1184, 4
          %v1212 = vsel %vm564, %v1196, %v1211
          %v1214 = vunpack.c.l.s4 1934713408
          %v1215 = vunpack.c.0.s8 %v1214
          %v1216 = vperm.slane %v1210, %v1215
          %v1218 = vunpack.c.l.s4 1934713408
          %v1219 = vunpack.c.0.s8 %v1218
          %v1220 = vperm.slane %v1212, %v1219
          %v1221 = vrot.slane %v1204, 4
          %v1222 = vsel %vm564, 0.0, %v1221
          %v1223 = vrot.slane %v1208, 4
          %v1224 = vsel %vm564, 0.0, %v1223
          %v1225 = vrot.slane %v1216, 4
          %v1226 = vsel %vm564, 0.0, %v1225
          %v1227 = vrot.slane %v1220, 4
          %v1228 = vsel %vm564, 0.0, %v1227
          %v1229 = vrot.slane %v1044, 4
          %v1230 = vsel %vm564, %v1229, %v521
          %v1231 = vrot.slane %v521, 4
          %v1232 = vsel %vm564, %v1044, %v1231
          %v1234 = vunpack.c.l.s4 1983009808
          %v1235 = vunpack.c.0.s8 %v1234
          %v1236 = vperm.slane %v1230, %v1235
          %v1238 = vunpack.c.l.s4 1983009808
          %v1239 = vunpack.c.0.s8 %v1238
          %v1240 = vperm.slane %v1232, %v1239
          %v1241 = vrot.slane %v1056, 4
          %v1242 = vsel %vm564, %v1241, %v1032
          %v1243 = vrot.slane %v1032, 4
          %v1244 = vsel %vm564, %v1056, %v1243
          %v1246 = vunpack.c.l.s4 1983009808
          %v1247 = vunpack.c.0.s8 %v1246
          %v1248 = vperm.slane %v1242, %v1247
          %v1250 = vunpack.c.l.s4 1983009808
          %v1251 = vunpack.c.0.s8 %v1250
          %v1252 = vperm.slane %v1244, %v1251
          %v1253 = vrot.slane %v1248, 4
          %v1254 = vsel %vm564, %v1253, %v1236
          %v1255 = vrot.slane %v1236, 4
          %v1256 = vsel %vm564, %v1248, %v1255
          %v1258 = vunpack.c.l.s4 1934713408
          %v1259 = vunpack.c.0.s8 %v1258
          %v1260 = vperm.slane %v1254, %v1259
          %v1262 = vunpack.c.l.s4 1934713408
          %v1263 = vunpack.c.0.s8 %v1262
          %v1264 = vperm.slane %v1256, %v1263
          %v1265 = vrot.slane %v1252, 4
          %v1266 = vsel %vm564, %v1265, %v1240
          %v1267 = vrot.slane %v1240, 4
          %v1268 = vsel %vm564, %v1252, %v1267
          %v1270 = vunpack.c.l.s4 1934713408
          %v1271 = vunpack.c.0.s8 %v1270
          %v1272 = vperm.slane %v1266, %v1271
          %v1274 = vunpack.c.l.s4 1934713408
          %v1275 = vunpack.c.0.s8 %v1274
          %v1276 = vperm.slane %v1268, %v1275
          %v1277 = vrot.slane %v1260, 4
          %v1278 = vsel %vm564, 0.0, %v1277
          %v1279 = vrot.slane %v1264, 4
          %v1280 = vsel %vm564, 0.0, %v1279
          %v1281 = vrot.slane %v1272, 4
          %v1282 = vsel %vm564, 0.0, %v1281
          %v1283 = vrot.slane %v1276, 4
          %v1284 = vsel %vm564, 0.0, %v1283
          %v1285 = vsel %vm564, %v1111, %v1092
          %v1287 = vunpack.c.l.s4 1983009808
          %v1288 = vunpack.c.0.s8 %v1287
          %v1289 = vperm.slane %v1285, %v1288
          %v1290 = vrot.slane %v1112, 4
          %v1291 = vsel %vm564, %v1290, %v1110
          %v1293 = vunpack.c.l.s4 1983009808
          %v1294 = vunpack.c.0.s8 %v1293
          %v1295 = vperm.slane %v1291, %v1294
          %v1296 = vsel %vm564, %v1115, %v1104
          %v1298 = vunpack.c.l.s4 1983009808
          %v1299 = vunpack.c.0.s8 %v1298
          %v1300 = vperm.slane %v1296, %v1299
          %v1301 = vrot.slane %v1116, 4
          %v1302 = vsel %vm564, %v1301, %v1114
          %v1304 = vunpack.c.l.s4 1983009808
          %v1305 = vunpack.c.0.s8 %v1304
          %v1306 = vperm.slane %v1302, %v1305
          %v1307 = vrot.slane %v1295, 4
          %v1308 = vsel %vm564, %v1307, %v1289
          %v1309 = vrot.slane %v1289, 4
          %v1310 = vsel %vm564, %v1295, %v1309
          %v1312 = vunpack.c.l.s4 1934713408
          %v1313 = vunpack.c.0.s8 %v1312
          %v1314 = vperm.slane %v1308, %v1313
          %v1316 = vunpack.c.l.s4 1934713408
          %v1317 = vunpack.c.0.s8 %v1316
          %v1318 = vperm.slane %v1310, %v1317
          %v1319 = vrot.slane %v1306, 4
          %v1320 = vsel %vm564, %v1319, %v1300
          %v1321 = vrot.slane %v1300, 4
          %v1322 = vsel %vm564, %v1306, %v1321
          %v1324 = vunpack.c.l.s4 1934713408
          %v1325 = vunpack.c.0.s8 %v1324
          %v1326 = vperm.slane %v1320, %v1325
          %v1328 = vunpack.c.l.s4 1934713408
          %v1329 = vunpack.c.0.s8 %v1328
          %v1330 = vperm.slane %v1322, %v1329
          %v1331 = vrot.slane %v1326, 4
          %v1332 = vsel %vm564, %v1331, %v1314
          %v1333 = vrot.slane %v1314, 4
          %v1334 = vsel %vm564, %v1326, %v1333
          %v1335 = vrot.slane %v1330, 4
          %v1336 = vsel %vm564, %v1335, %v1318
          %v1337 = vrot.slane %v1318, 4
          %v1338 = vsel %vm564, %v1330, %v1337
          %v1339 = vsel %vm564, %v1167, %v1148
          %v1341 = vunpack.c.l.s4 1983009808
          %v1342 = vunpack.c.0.s8 %v1341
          %v1343 = vperm.slane %v1339, %v1342
          %v1344 = vrot.slane %v1168, 4
          %v1345 = vsel %vm564, %v1344, %v1166
          %v1347 = vunpack.c.l.s4 1983009808
          %v1348 = vunpack.c.0.s8 %v1347
          %v1349 = vperm.slane %v1345, %v1348
          %v1350 = vsel %vm564, %v1171, %v1160
          %v1352 = vunpack.c.l.s4 1983009808
          %v1353 = vunpack.c.0.s8 %v1352
          %v1354 = vperm.slane %v1350, %v1353
          %v1355 = vrot.slane %v1172, 4
          %v1356 = vsel %vm564, %v1355, %v1170
          %v1358 = vunpack.c.l.s4 1983009808
          %v1359 = vunpack.c.0.s8 %v1358
          %v1360 = vperm.slane %v1356, %v1359
          %v1361 = vrot.slane %v1349, 4
          %v1362 = vsel %vm564, %v1361, %v1343
          %v1363 = vrot.slane %v1343, 4
          %v1364 = vsel %vm564, %v1349, %v1363
          %v1366 = vunpack.c.l.s4 1934713408
          %v1367 = vunpack.c.0.s8 %v1366
          %v1368 = vperm.slane %v1362, %v1367
          %v1370 = vunpack.c.l.s4 1934713408
          %v1371 = vunpack.c.0.s8 %v1370
          %v1372 = vperm.slane %v1364, %v1371
          %v1373 = vrot.slane %v1360, 4
          %v1374 = vsel %vm564, %v1373, %v1354
          %v1375 = vrot.slane %v1354, 4
          %v1376 = vsel %vm564, %v1360, %v1375
          %v1378 = vunpack.c.l.s4 1934713408
          %v1379 = vunpack.c.0.s8 %v1378
          %v1380 = vperm.slane %v1374, %v1379
          %v1382 = vunpack.c.l.s4 1934713408
          %v1383 = vunpack.c.0.s8 %v1382
          %v1384 = vperm.slane %v1376, %v1383
          %v1385 = vrot.slane %v1380, 4
          %v1386 = vsel %vm564, %v1385, %v1368
          %v1387 = vrot.slane %v1368, 4
          %v1388 = vsel %vm564, %v1380, %v1387
          %v1389 = vrot.slane %v1384, 4
          %v1390 = vsel %vm564, %v1389, %v1372
          %v1391 = vrot.slane %v1372, 4
          %v1392 = vsel %vm564, %v1384, %v1391
          %v1393 = vsel %vm564, %v1223, %v1204
          %v1395 = vunpack.c.l.s4 1983009808
          %v1396 = vunpack.c.0.s8 %v1395
          %v1397 = vperm.slane %v1393, %v1396
          %v1398 = vrot.slane %v1224, 4
          %v1399 = vsel %vm564, %v1398, %v1222
          %v1401 = vunpack.c.l.s4 1983009808
          %v1402 = vunpack.c.0.s8 %v1401
          %v1403 = vperm.slane %v1399, %v1402
          %v1404 = vsel %vm564, %v1227, %v1216
          %v1406 = vunpack.c.l.s4 1983009808
          %v1407 = vunpack.c.0.s8 %v1406
          %v1408 = vperm.slane %v1404, %v1407
          %v1409 = vrot.slane %v1228, 4
          %v1410 = vsel %vm564, %v1409, %v1226
          %v1412 = vunpack.c.l.s4 1983009808
          %v1413 = vunpack.c.0.s8 %v1412
          %v1414 = vperm.slane %v1410, %v1413
          %v1415 = vrot.slane %v1403, 4
          %v1416 = vsel %vm564, %v1415, %v1397
          %v1417 = vrot.slane %v1397, 4
          %v1418 = vsel %vm564, %v1403, %v1417
          %v1420 = vunpack.c.l.s4 1934713408
          %v1421 = vunpack.c.0.s8 %v1420
          %v1422 = vperm.slane %v1416, %v1421
          %v1424 = vunpack.c.l.s4 1934713408
          %v1425 = vunpack.c.0.s8 %v1424
          %v1426 = vperm.slane %v1418, %v1425
          %v1427 = vrot.slane %v1414, 4
          %v1428 = vsel %vm564, %v1427, %v1408
          %v1429 = vrot.slane %v1408, 4
          %v1430 = vsel %vm564, %v1414, %v1429
          %v1432 = vunpack.c.l.s4 1934713408
          %v1433 = vunpack.c.0.s8 %v1432
          %v1434 = vperm.slane %v1428, %v1433
          %v1436 = vunpack.c.l.s4 1934713408
          %v1437 = vunpack.c.0.s8 %v1436
          %v1438 = vperm.slane %v1430, %v1437
          %v1439 = vrot.slane %v1434, 4
          %v1440 = vsel %vm564, %v1439, %v1422
          %v1441 = vrot.slane %v1422, 4
          %v1442 = vsel %vm564, %v1434, %v1441
          %v1443 = vrot.slane %v1438, 4
          %v1444 = vsel %vm564, %v1443, %v1426
          %v1445 = vrot.slane %v1426, 4
          %v1446 = vsel %vm564, %v1438, %v1445
          %v1447 = vsel %vm564, %v1279, %v1260
          %v1449 = vunpack.c.l.s4 1983009808
          %v1450 = vunpack.c.0.s8 %v1449
          %v1451 = vperm.slane %v1447, %v1450
          %v1452 = vrot.slane %v1280, 4
          %v1453 = vsel %vm564, %v1452, %v1278
          %v1455 = vunpack.c.l.s4 1983009808
          %v1456 = vunpack.c.0.s8 %v1455
          %v1457 = vperm.slane %v1453, %v1456
          %v1458 = vsel %vm564, %v1283, %v1272
          %v1460 = vunpack.c.l.s4 1983009808
          %v1461 = vunpack.c.0.s8 %v1460
          %v1462 = vperm.slane %v1458, %v1461
          %v1463 = vrot.slane %v1284, 4
          %v1464 = vsel %vm564, %v1463, %v1282
          %v1466 = vunpack.c.l.s4 1983009808
          %v1467 = vunpack.c.0.s8 %v1466
          %v1468 = vperm.slane %v1464, %v1467
          %v1469 = vrot.slane %v1457, 4
          %v1470 = vsel %vm564, %v1469, %v1451
          %v1471 = vrot.slane %v1451, 4
          %v1472 = vsel %vm564, %v1457, %v1471
          %v1474 = vunpack.c.l.s4 1934713408
          %v1475 = vunpack.c.0.s8 %v1474
          %v1476 = vperm.slane %v1470, %v1475
          %v1478 = vunpack.c.l.s4 1934713408
          %v1479 = vunpack.c.0.s8 %v1478
          %v1480 = vperm.slane %v1472, %v1479
          %v1481 = vrot.slane %v1468, 4
          %v1482 = vsel %vm564, %v1481, %v1462
          %v1483 = vrot.slane %v1462, 4
          %v1484 = vsel %vm564, %v1468, %v1483
          %v1486 = vunpack.c.l.s4 1934713408
          %v1487 = vunpack.c.0.s8 %v1486
          %v1488 = vperm.slane %v1482, %v1487
          %v1490 = vunpack.c.l.s4 1934713408
          %v1491 = vunpack.c.0.s8 %v1490
          %v1492 = vperm.slane %v1484, %v1491
          %v1493 = vrot.slane %v1488, 4
          %v1494 = vsel %vm564, %v1493, %v1476
          %v1495 = vrot.slane %v1476, 4
          %v1496 = vsel %vm564, %v1488, %v1495
          %v1497 = vrot.slane %v1492, 4
          %v1498 = vsel %vm564, %v1497, %v1480
          %v1499 = vrot.slane %v1480, 4
          %v1500 = vsel %vm564, %v1492, %v1499
          %1501 = vst.msk [vmem:[#allocation3] sm:$0xff] %vm1004, %v1332
          %1502 = vst.msk [vmem:[#allocation3 + $0x8] sm:$0xff] %vm1004, %v1386
          %1503 = vst.msk [vmem:[#allocation3 + $0x10] sm:$0xff] %vm1004, %v1440
          %1504 = vst.msk [vmem:[#allocation3 + $0x18] sm:$0xff] %vm1004, %v1494
          %1505 = vst.msk [vmem:[#allocation3 + $0x20] sm:$0xff] %vm1004, %v1334
          %1506 = vst.msk [vmem:[#allocation3 + $0x28] sm:$0xff] %vm1004, %v1388
          %1507 = vst.msk [vmem:[#allocation3 + $0x30] sm:$0xff] %vm1004, %v1442
          %1508 = vst.msk [vmem:[#allocation3 + $0x38] sm:$0xff] %vm1004, %v1496
          %1509 = vst.msk [vmem:[#allocation3 + $0x40] sm:$0xff] %vm1004, %v1336
          %1510 = vst.msk [vmem:[#allocation3 + $0x48] sm:$0xff] %vm1004, %v1390
          %1511 = vst.msk [vmem:[#allocation3 + $0x50] sm:$0xff] %vm1004, %v1444
          %1512 = vst.msk [vmem:[#allocation3 + $0x58] sm:$0xff] %vm1004, %v1498
          %1513 = vst.msk [vmem:[#allocation3 + $0x60] sm:$0xff] %vm1004, %v1338
          %1514 = vst.msk [vmem:[#allocation3 + $0x68] sm:$0xff] %vm1004, %v1392
          %1515 = vst.msk [vmem:[#allocation3 + $0x70] sm:$0xff] %vm1004, %v1446
          %1516 = vst.msk [vmem:[#allocation3 + $0x78] sm:$0xff] %vm1004, %v1500
        $region80: #{tpu_custom_call.1} parent=55 // pred_fallthru
          _
        %s1517 = smul.u32 %s31, 16
        %s1518 = scalar_lea.vmem [#allocation7], %s1517
        %v1519 = vld [vmem:[%s1518] sm:$0xff]
        %v1520 = vld [vmem:[%s1518 + $0x8] sm:$0xff]
        %v1521 = vld [vmem:[#allocation10] sm:$0xff]
        %v1522 = vld [vmem:[#allocation10 + $0x8] sm:$0xff]
        %v1523 = vld [vmem:[#allocation10 + $0x10] sm:$0xff]
        %v1524 = vld [vmem:[#allocation10 + $0x18] sm:$0xff]
        %v1525 = vld [vmem:[#allocation10 + $0x20] sm:$0xff]
        %v1526 = vld [vmem:[#allocation10 + $0x28] sm:$0xff]
        %v1527 = vld [vmem:[#allocation10 + $0x30] sm:$0xff]
        %v1528 = vld [vmem:[#allocation10 + $0x38] sm:$0xff]
        %v1529 = vld [vmem:[#allocation10 + $0x40] sm:$0xff]
        %v1530 = vld [vmem:[#allocation10 + $0x48] sm:$0xff]
        %v1531 = vld [vmem:[#allocation10 + $0x50] sm:$0xff]
        %v1532 = vld [vmem:[#allocation10 + $0x58] sm:$0xff]
        %v1533 = vld [vmem:[#allocation10 + $0x60] sm:$0xff]
        %v1534 = vld [vmem:[#allocation10 + $0x68] sm:$0xff]
        %v1535 = vld [vmem:[#allocation10 + $0x70] sm:$0xff]
        %v1536 = vld [vmem:[#allocation10 + $0x78] sm:$0xff]
        %v1537 = vld [vmem:[%s2] sm:$0x1]
        %v1539 = vperm.slane %v1537, 0
        %1541 = vmatpush.msra.mxu0 %v1536
        %1542 = vmatpush.msra.mxu0 %v1535
        %1543 = vmatpush.msra.mxu0 %v1534
        %1544 = vmatpush.msra.mxu0 %v1533
        %1545 = vmatpush.msra.mxu0 %v1532
        %1546 = vmatpush.msra.mxu0 %v1531
        %1547 = vmatpush.msra.mxu0 %v1530
        %1548 = vmatpush.msra.mxu0 %v1529
        %1549 = vmatpush.msra.mxu0 %v1528
        %1550 = vmatpush.msra.mxu0 %v1527
        %1551 = vmatpush.msra.mxu0 %v1526
        %1552 = vmatpush.msra.mxu0 %v1525
        %1553 = vmatpush.msra.mxu0 %v1524
        %1554 = vmatpush.msra.mxu0 %v1523
        %1555 = vmatpush.msra.mxu0 %v1522
        %1556 = vmatpush.msra.mxu0 %v1521
        %1557 = vmatmul.f32.gmra.mxu0 %v1519
        %v1558 = vpop.f32.mrf.mxu0
        %v1559 = vadd.f32 %v1539, %v1558
        %1560 = vmatmul.f32.gmra.mxu0 %v1520
        %v1561 = vpop.f32.mrf.mxu0
        %v1562 = vadd.f32 %v1539, %v1561
        %1563 = vdwg.mxu0
        %1566 = vrot.lane.b32.xlu0 %v1559, 96
        %v1567 = vpop.permute.xlu0 %1566
        %1568 = vrot.lane.b32.xlu0 %v1562, 96
        %v1569 = vpop.permute.xlu0 %1568
        %1572 = vrot.lane.b32.xlu0 %v1559, 64
        %v1573 = vpop.permute.xlu0 %1572
        %1574 = vrot.lane.b32.xlu0 %v1562, 64
        %v1575 = vpop.permute.xlu0 %1574
        %1578 = vrot.lane.b32.xlu0 %v1559, 32
        %v1579 = vpop.permute.xlu0 %1578
        %1580 = vrot.lane.b32.xlu0 %v1562, 32
        %v1581 = vpop.permute.xlu0 %1580
        %v1584 = vrot.slane %v1573, 4
        %vm1585 = vcmask 1047556
        %v1586 = vsel %vm1585, %v1584, %v1559
        %v1587 = vrot.slane %v1559, 4
        %v1588 = vsel %vm1585, %v1573, %v1587
        %v1590 = vunpack.c.l.s4 1983009808
        %v1591 = vunpack.c.0.s8 %v1590
        %v1592 = vperm.slane %v1586, %v1591
        %v1594 = vunpack.c.l.s4 1983009808
        %v1595 = vunpack.c.0.s8 %v1594
        %v1596 = vperm.slane %v1588, %v1595
        %v1597 = vrot.slane %v1579, 4
        %v1598 = vsel %vm1585, %v1597, %v1567
        %v1599 = vrot.slane %v1567, 4
        %v1600 = vsel %vm1585, %v1579, %v1599
        %v1602 = vunpack.c.l.s4 1983009808
        %v1603 = vunpack.c.0.s8 %v1602
        %v1604 = vperm.slane %v1598, %v1603
        %v1606 = vunpack.c.l.s4 1983009808
        %v1607 = vunpack.c.0.s8 %v1606
        %v1608 = vperm.slane %v1600, %v1607
        %v1609 = vrot.slane %v1604, 4
        %v1610 = vsel %vm1585, %v1609, %v1592
        %v1611 = vrot.slane %v1592, 4
        %v1612 = vsel %vm1585, %v1604, %v1611
        %v1614 = vunpack.c.l.s4 1934713408
        %v1615 = vunpack.c.0.s8 %v1614
        %v1616 = vperm.slane %v1610, %v1615
        %v1618 = vunpack.c.l.s4 1934713408
        %v1619 = vunpack.c.0.s8 %v1618
        %v1620 = vperm.slane %v1612, %v1619
        %v1621 = vrot.slane %v1608, 4
        %v1622 = vsel %vm1585, %v1621, %v1596
        %v1623 = vrot.slane %v1596, 4
        %v1624 = vsel %vm1585, %v1608, %v1623
        %v1626 = vunpack.c.l.s4 1934713408
        %v1627 = vunpack.c.0.s8 %v1626
        %v1628 = vperm.slane %v1622, %v1627
        %v1630 = vunpack.c.l.s4 1934713408
        %v1631 = vunpack.c.0.s8 %v1630
        %v1632 = vperm.slane %v1624, %v1631
        %v1633 = vrot.slane %v1616, 4
        %v1634 = vsel %vm1585, 0.0, %v1633
        %v1635 = vrot.slane %v1620, 4
        %v1636 = vsel %vm1585, 0.0, %v1635
        %v1637 = vrot.slane %v1628, 4
        %v1638 = vsel %vm1585, 0.0, %v1637
        %v1639 = vrot.slane %v1632, 4
        %v1640 = vsel %vm1585, 0.0, %v1639
        %v1641 = vrot.slane %v1575, 4
        %v1642 = vsel %vm1585, %v1641, %v1562
        %v1643 = vrot.slane %v1562, 4
        %v1644 = vsel %vm1585, %v1575, %v1643
        %v1646 = vunpack.c.l.s4 1983009808
        %v1647 = vunpack.c.0.s8 %v1646
        %v1648 = vperm.slane %v1642, %v1647
        %v1650 = vunpack.c.l.s4 1983009808
        %v1651 = vunpack.c.0.s8 %v1650
        %v1652 = vperm.slane %v1644, %v1651
        %v1653 = vrot.slane %v1581, 4
        %v1654 = vsel %vm1585, %v1653, %v1569
        %v1655 = vrot.slane %v1569, 4
        %v1656 = vsel %vm1585, %v1581, %v1655
        %v1658 = vunpack.c.l.s4 1983009808
        %v1659 = vunpack.c.0.s8 %v1658
        %v1660 = vperm.slane %v1654, %v1659
        %v1662 = vunpack.c.l.s4 1983009808
        %v1663 = vunpack.c.0.s8 %v1662
        %v1664 = vperm.slane %v1656, %v1663
        %v1665 = vrot.slane %v1660, 4
        %v1666 = vsel %vm1585, %v1665, %v1648
        %v1667 = vrot.slane %v1648, 4
        %v1668 = vsel %vm1585, %v1660, %v1667
        %v1670 = vunpack.c.l.s4 1934713408
        %v1671 = vunpack.c.0.s8 %v1670
        %v1672 = vperm.slane %v1666, %v1671
        %v1674 = vunpack.c.l.s4 1934713408
        %v1675 = vunpack.c.0.s8 %v1674
        %v1676 = vperm.slane %v1668, %v1675
        %v1677 = vrot.slane %v1664, 4
        %v1678 = vsel %vm1585, %v1677, %v1652
        %v1679 = vrot.slane %v1652, 4
        %v1680 = vsel %vm1585, %v1664, %v1679
        %v1682 = vunpack.c.l.s4 1934713408
        %v1683 = vunpack.c.0.s8 %v1682
        %v1684 = vperm.slane %v1678, %v1683
        %v1686 = vunpack.c.l.s4 1934713408
        %v1687 = vunpack.c.0.s8 %v1686
        %v1688 = vperm.slane %v1680, %v1687
        %v1689 = vrot.slane %v1672, 4
        %v1690 = vsel %vm1585, 0.0, %v1689
        %v1691 = vrot.slane %v1676, 4
        %v1692 = vsel %vm1585, 0.0, %v1691
        %v1693 = vrot.slane %v1684, 4
        %v1694 = vsel %vm1585, 0.0, %v1693
        %v1695 = vrot.slane %v1688, 4
        %v1696 = vsel %vm1585, 0.0, %v1695
        %v1697 = vsel %vm1585, %v1635, %v1616
        %v1699 = vunpack.c.l.s4 1983009808
        %v1700 = vunpack.c.0.s8 %v1699
        %v1701 = vperm.slane %v1697, %v1700
        %v1702 = vrot.slane %v1636, 4
        %v1703 = vsel %vm1585, %v1702, %v1634
        %v1705 = vunpack.c.l.s4 1983009808
        %v1706 = vunpack.c.0.s8 %v1705
        %v1707 = vperm.slane %v1703, %v1706
        %v1708 = vsel %vm1585, %v1639, %v1628
        %v1710 = vunpack.c.l.s4 1983009808
        %v1711 = vunpack.c.0.s8 %v1710
        %v1712 = vperm.slane %v1708, %v1711
        %v1713 = vrot.slane %v1640, 4
        %v1714 = vsel %vm1585, %v1713, %v1638
        %v1716 = vunpack.c.l.s4 1983009808
        %v1717 = vunpack.c.0.s8 %v1716
        %v1718 = vperm.slane %v1714, %v1717
        %v1719 = vrot.slane %v1707, 4
        %v1720 = vsel %vm1585, %v1719, %v1701
        %v1721 = vrot.slane %v1701, 4
        %v1722 = vsel %vm1585, %v1707, %v1721
        %v1724 = vunpack.c.l.s4 1934713408
        %v1725 = vunpack.c.0.s8 %v1724
        %v1726 = vperm.slane %v1720, %v1725
        %v1728 = vunpack.c.l.s4 1934713408
        %v1729 = vunpack.c.0.s8 %v1728
        %v1730 = vperm.slane %v1722, %v1729
        %v1731 = vrot.slane %v1718, 4
        %v1732 = vsel %vm1585, %v1731, %v1712
        %v1733 = vrot.slane %v1712, 4
        %v1734 = vsel %vm1585, %v1718, %v1733
        %v1736 = vunpack.c.l.s4 1934713408
        %v1737 = vunpack.c.0.s8 %v1736
        %v1738 = vperm.slane %v1732, %v1737
        %v1740 = vunpack.c.l.s4 1934713408
        %v1741 = vunpack.c.0.s8 %v1740
        %v1742 = vperm.slane %v1734, %v1741
        %v1743 = vrot.slane %v1738, 4
        %v1744 = vsel %vm1585, %v1743, %v1726
        %v1745 = vrot.slane %v1726, 4
        %v1746 = vsel %vm1585, %v1738, %v1745
        %v1747 = vrot.slane %v1742, 4
        %v1748 = vsel %vm1585, %v1747, %v1730
        %v1749 = vrot.slane %v1730, 4
        %v1750 = vsel %vm1585, %v1742, %v1749
        %v1751 = vsel %vm1585, %v1691, %v1672
        %v1753 = vunpack.c.l.s4 1983009808
        %v1754 = vunpack.c.0.s8 %v1753
        %v1755 = vperm.slane %v1751, %v1754
        %v1756 = vrot.slane %v1692, 4
        %v1757 = vsel %vm1585, %v1756, %v1690
        %v1759 = vunpack.c.l.s4 1983009808
        %v1760 = vunpack.c.0.s8 %v1759
        %v1761 = vperm.slane %v1757, %v1760
        %v1762 = vsel %vm1585, %v1695, %v1684
        %v1764 = vunpack.c.l.s4 1983009808
        %v1765 = vunpack.c.0.s8 %v1764
        %v1766 = vperm.slane %v1762, %v1765
        %v1767 = vrot.slane %v1696, 4
        %v1768 = vsel %vm1585, %v1767, %v1694
        %v1770 = vunpack.c.l.s4 1983009808
        %v1771 = vunpack.c.0.s8 %v1770
        %v1772 = vperm.slane %v1768, %v1771
        %v1773 = vrot.slane %v1761, 4
        %v1774 = vsel %vm1585, %v1773, %v1755
        %v1775 = vrot.slane %v1755, 4
        %v1776 = vsel %vm1585, %v1761, %v1775
        %v1778 = vunpack.c.l.s4 1934713408
        %v1779 = vunpack.c.0.s8 %v1778
        %v1780 = vperm.slane %v1774, %v1779
        %v1782 = vunpack.c.l.s4 1934713408
        %v1783 = vunpack.c.0.s8 %v1782
        %v1784 = vperm.slane %v1776, %v1783
        %v1785 = vrot.slane %v1772, 4
        %v1786 = vsel %vm1585, %v1785, %v1766
        %v1787 = vrot.slane %v1766, 4
        %v1788 = vsel %vm1585, %v1772, %v1787
        %v1790 = vunpack.c.l.s4 1934713408
        %v1791 = vunpack.c.0.s8 %v1790
        %v1792 = vperm.slane %v1786, %v1791
        %v1794 = vunpack.c.l.s4 1934713408
        %v1795 = vunpack.c.0.s8 %v1794
        %v1796 = vperm.slane %v1788, %v1795
        %v1797 = vrot.slane %v1792, 4
        %v1798 = vsel %vm1585, %v1797, %v1780
        %v1799 = vrot.slane %v1780, 4
        %v1800 = vsel %vm1585, %v1792, %v1799
        %v1801 = vrot.slane %v1796, 4
        %v1802 = vsel %vm1585, %v1801, %v1784
        %v1803 = vrot.slane %v1784, 4
        %v1804 = vsel %vm1585, %v1796, %v1803
        %vm1805 = vcmask 7168
        %1806 = vst.msk [vmem:[#allocation4] sm:$0xff] %vm1805, -1e+30
        %1807 = vst.msk [vmem:[#allocation4 + $0x8] sm:$0xff] %vm1805, -1e+30
        %1808 = vst.msk [vmem:[#allocation4 + $0x10] sm:$0xff] %vm1805, -1e+30
        %1809 = vst.msk [vmem:[#allocation4 + $0x18] sm:$0xff] %vm1805, -1e+30
        %1810 = vst.msk [vmem:[#allocation4 + $0x20] sm:$0xff] %vm1805, -1e+30
        %1811 = vst.msk [vmem:[#allocation4 + $0x28] sm:$0xff] %vm1805, -1e+30
        %1812 = vst.msk [vmem:[#allocation4 + $0x30] sm:$0xff] %vm1805, -1e+30
        %1813 = vst.msk [vmem:[#allocation4 + $0x38] sm:$0xff] %vm1805, -1e+30
        %1814 = vst.msk [vmem:[#allocation5] sm:$0xff] %vm1805, 0.0
        %1815 = vst.msk [vmem:[#allocation5 + $0x8] sm:$0xff] %vm1805, 0.0
        %1816 = vst.msk [vmem:[#allocation5 + $0x10] sm:$0xff] %vm1805, 0.0
        %1817 = vst.msk [vmem:[#allocation5 + $0x18] sm:$0xff] %vm1805, 0.0
        %1818 = vst.msk [vmem:[#allocation5 + $0x20] sm:$0xff] %vm1805, 0.0
        %1819 = vst.msk [vmem:[#allocation5 + $0x28] sm:$0xff] %vm1805, 0.0
        %1820 = vst.msk [vmem:[#allocation5 + $0x30] sm:$0xff] %vm1805, 0.0
        %1821 = vst.msk [vmem:[#allocation5 + $0x38] sm:$0xff] %vm1805, 0.0
        %vm1822 = vcmask 261120
        %1823 = vst.msk [vmem:[#allocation6] sm:$0xff] %vm1822, 0.0
        %1824 = vst.msk [vmem:[#allocation6 + $0x8] sm:$0xff] %vm1822, 0.0
        %1825 = vst.msk [vmem:[#allocation6 + $0x10] sm:$0xff] %vm1822, 0.0
        %1826 = vst.msk [vmem:[#allocation6 + $0x18] sm:$0xff] %vm1822, 0.0
        %1827 = vst.msk [vmem:[#allocation6 + $0x20] sm:$0xff] %vm1822, 0.0
        %1828 = vst.msk [vmem:[#allocation6 + $0x28] sm:$0xff] %vm1822, 0.0
        %1829 = vst.msk [vmem:[#allocation6 + $0x30] sm:$0xff] %vm1822, 0.0
        %1830 = vst.msk [vmem:[#allocation6 + $0x38] sm:$0xff] %vm1822, 0.0
        loop: start=0, step=1, limit=2
        $region81: #{tpu_custom_call.1} parent=55 // loop_pre_header
          _
        $region82: #{tpu_custom_call.1} parent=55 // loop_header
          %s1832 = sphi 0, %s1836
          %p1833 = scmp.ge.s32.totalorder %s1832, 2
        $region83: #{tpu_custom_call.1} parent=55 // loop_header_branch
          %1835 = sbr.rel (%p1833) target = $region87
        $region84: #{tpu_custom_call.1} parent=55 // loop_body
          %s1837 = smul.u32 %s1832, 16
          %s1838 = scalar_lea.vmem [#allocation2], %s1837
          %v1839 = vld [vmem:[%s1838] sm:$0xff]
          %v1840 = vld [vmem:[%s1838 + $0x8] sm:$0xff]
          %v1841 = vld [vmem:[%s1838 + $0x20] sm:$0xff]
          %v1842 = vld [vmem:[%s1838 + $0x28] sm:$0xff]
          %v1843 = vld [vmem:[%s1838 + $0x40] sm:$0xff]
          %v1844 = vld [vmem:[%s1838 + $0x48] sm:$0xff]
          %v1845 = vld [vmem:[%s1838 + $0x60] sm:$0xff]
          %v1846 = vld [vmem:[%s1838 + $0x68] sm:$0xff]
          %s1847 = scalar_lea.vmem [#allocation3], %s1837
          %v1848 = vld [vmem:[%s1847] sm:$0xff]
          %v1849 = vld [vmem:[%s1847 + $0x8] sm:$0xff]
          %v1850 = vld [vmem:[%s1847 + $0x20] sm:$0xff]
          %v1851 = vld [vmem:[%s1847 + $0x28] sm:$0xff]
          %v1852 = vld [vmem:[%s1847 + $0x40] sm:$0xff]
          %v1853 = vld [vmem:[%s1847 + $0x48] sm:$0xff]
          %v1854 = vld [vmem:[%s1847 + $0x60] sm:$0xff]
          %v1855 = vld [vmem:[%s1847 + $0x68] sm:$0xff]
          %v1857 = vsel %vm1822, %v1744, 0
          %v1860 = vsel %vm1822, %v1798, 0
          %v1863 = vsel %vm1822, %v1839, 0
          %v1866 = vsel %vm1822, %v1840, 0
          %1868 = vmatpush.xpose.msra.mxu0 0.0
          %1869 = vmatpush.xpose.msra.mxu0 0.0
          %1870 = vmatpush.xpose.msra.mxu0 0.0
          %1871 = vmatpush.xpose.msra.mxu0 0.0
          %1872 = vmatpush.xpose.msra.mxu0 0.0
          %1873 = vmatpush.xpose.msra.mxu0 0.0
          %1874 = vmatpush.xpose.msra.mxu0 0.0
          %1875 = vmatpush.xpose.msra.mxu0 0.0
          %1876 = vmatpush.xpose.msra.mxu0 0.0
          %1877 = vmatpush.xpose.msra.mxu0 0.0
          %1878 = vmatpush.xpose.msra.mxu0 0.0
          %1879 = vmatpush.xpose.msra.mxu0 0.0
          %1880 = vmatpush.xpose.msra.mxu0 0.0
          %1881 = vmatpush.xpose.msra.mxu0 0.0
          %1882 = vmatpush.xpose.msra.mxu0 %v1866
          %1883 = vmatpush.xpose.msra.mxu0 %v1863
          %1884 = vmatmul.f32.gmra.mxu0 %v1857
          %v1885 = vpop.f32.mrf.mxu0
          %v1886 = vadd.f32 0.0, %v1885
          %1887 = vmatmul.f32.gmra.mxu0 %v1860
          %v1888 = vpop.f32.mrf.mxu0
          %v1889 = vadd.f32 0.0, %v1888
          %1890 = vdwg.mxu0
          %v1892 = vsel %vm1822, %v1746, 0
          %v1895 = vsel %vm1822, %v1800, 0
          %v1898 = vsel %vm1822, %v1841, 0
          %v1901 = vsel %vm1822, %v1842, 0
          %1903 = vmatpush.xpose.msra.mxu0 0.0
          %1904 = vmatpush.xpose.msra.mxu0 0.0
          %1905 = vmatpush.xpose.msra.mxu0 0.0
          %1906 = vmatpush.xpose.msra.mxu0 0.0
          %1907 = vmatpush.xpose.msra.mxu0 0.0
          %1908 = vmatpush.xpose.msra.mxu0 0.0
          %1909 = vmatpush.xpose.msra.mxu0 0.0
          %1910 = vmatpush.xpose.msra.mxu0 0.0
          %1911 = vmatpush.xpose.msra.mxu0 0.0
          %1912 = vmatpush.xpose.msra.mxu0 0.0
          %1913 = vmatpush.xpose.msra.mxu0 0.0
          %1914 = vmatpush.xpose.msra.mxu0 0.0
          %1915 = vmatpush.xpose.msra.mxu0 0.0
          %1916 = vmatpush.xpose.msra.mxu0 0.0
          %1917 = vmatpush.xpose.msra.mxu0 %v1901
          %1918 = vmatpush.xpose.msra.mxu0 %v1898
          %1919 = vmatmul.f32.gmra.mxu0 %v1892
          %v1920 = vpop.f32.mrf.mxu0
          %v1921 = vadd.f32 0.0, %v1920
          %1922 = vmatmul.f32.gmra.mxu0 %v1895
          %v1923 = vpop.f32.mrf.mxu0
          %v1924 = vadd.f32 0.0, %v1923
          %1925 = vdwg.mxu0
          %v1927 = vsel %vm1822, %v1748, 0
          %v1930 = vsel %vm1822, %v1802, 0
          %v1933 = vsel %vm1822, %v1843, 0
          %v1936 = vsel %vm1822, %v1844, 0
          %1938 = vmatpush.xpose.msra.mxu0 0.0
          %1939 = vmatpush.xpose.msra.mxu0 0.0
          %1940 = vmatpush.xpose.msra.mxu0 0.0
          %1941 = vmatpush.xpose.msra.mxu0 0.0
          %1942 = vmatpush.xpose.msra.mxu0 0.0
          %1943 = vmatpush.xpose.msra.mxu0 0.0
          %1944 = vmatpush.xpose.msra.mxu0 0.0
          %1945 = vmatpush.xpose.msra.mxu0 0.0
          %1946 = vmatpush.xpose.msra.mxu0 0.0
          %1947 = vmatpush.xpose.msra.mxu0 0.0
          %1948 = vmatpush.xpose.msra.mxu0 0.0
          %1949 = vmatpush.xpose.msra.mxu0 0.0
          %1950 = vmatpush.xpose.msra.mxu0 0.0
          %1951 = vmatpush.xpose.msra.mxu0 0.0
          %1952 = vmatpush.xpose.msra.mxu0 %v1936
          %1953 = vmatpush.xpose.msra.mxu0 %v1933
          %1954 = vmatmul.f32.gmra.mxu0 %v1927
          %v1955 = vpop.f32.mrf.mxu0
          %v1956 = vadd.f32 0.0, %v1955
          %1957 = vmatmul.f32.gmra.mxu0 %v1930
          %v1958 = vpop.f32.mrf.mxu0
          %v1959 = vadd.f32 0.0, %v1958
          %1960 = vdwg.mxu0
          %v1962 = vsel %vm1822, %v1750, 0
          %v1965 = vsel %vm1822, %v1804, 0
          %v1968 = vsel %vm1822, %v1845, 0
          %v1971 = vsel %vm1822, %v1846, 0
          %1973 = vmatpush.xpose.msra.mxu0 0.0
          %1974 = vmatpush.xpose.msra.mxu0 0.0
          %1975 = vmatpush.xpose.msra.mxu0 0.0
          %1976 = vmatpush.xpose.msra.mxu0 0.0
          %1977 = vmatpush.xpose.msra.mxu0 0.0
          %1978 = vmatpush.xpose.msra.mxu0 0.0
          %1979 = vmatpush.xpose.msra.mxu0 0.0
          %1980 = vmatpush.xpose.msra.mxu0 0.0
          %1981 = vmatpush.xpose.msra.mxu0 0.0
          %1982 = vmatpush.xpose.msra.mxu0 0.0
          %1983 = vmatpush.xpose.msra.mxu0 0.0
          %1984 = vmatpush.xpose.msra.mxu0 0.0
          %1985 = vmatpush.xpose.msra.mxu0 0.0
          %1986 = vmatpush.xpose.msra.mxu0 0.0
          %1987 = vmatpush.xpose.msra.mxu0 %v1971
          %1988 = vmatpush.xpose.msra.mxu0 %v1968
          %1989 = vmatmul.f32.gmra.mxu0 %v1962
          %v1990 = vpop.f32.mrf.mxu0
          %v1991 = vadd.f32 0.0, %v1990
          %1992 = vmatmul.f32.gmra.mxu0 %v1965
          %v1993 = vpop.f32.mrf.mxu0
          %v1994 = vadd.f32 0.0, %v1993
          %1995 = vdwg.mxu0
          %v1996 = vld [vmem:[#allocation4] sm:$0xff]
          %v1997 = vld [vmem:[#allocation4 + $0x8] sm:$0xff]
          %v1998 = vld [vmem:[#allocation4 + $0x10] sm:$0xff]
          %v1999 = vld [vmem:[#allocation4 + $0x18] sm:$0xff]
          %v2000 = vld [vmem:[#allocation4 + $0x20] sm:$0xff]
          %v2001 = vld [vmem:[#allocation4 + $0x28] sm:$0xff]
          %v2002 = vld [vmem:[#allocation4 + $0x30] sm:$0xff]
          %v2003 = vld [vmem:[#allocation4 + $0x38] sm:$0xff]
          %vm2004 = vcmask 130048
          %v2005 = vsel %vm2004, %v1886, -inf
          %2006 = vmax.xlane.f32.xlu0 %v2005
          %v2007 = vpop.xlane.xlu0 %2006
          %v2008 = vsel %vm2004, %v1889, -inf
          %2009 = vmax.xlane.f32.xlu0 %v2008
          %v2010 = vpop.xlane.xlu0 %2009
          %v2011 = vsel %vm2004, %v1921, -inf
          %2012 = vmax.xlane.f32.xlu0 %v2011
          %v2013 = vpop.xlane.xlu0 %2012
          %v2014 = vsel %vm2004, %v1924, -inf
          %2015 = vmax.xlane.f32.xlu0 %v2014
          %v2016 = vpop.xlane.xlu0 %2015
          %v2017 = vsel %vm2004, %v1956, -inf
          %2018 = vmax.xlane.f32.xlu0 %v2017
          %v2019 = vpop.xlane.xlu0 %2018
          %v2020 = vsel %vm2004, %v1959, -inf
          %2021 = vmax.xlane.f32.xlu0 %v2020
          %v2022 = vpop.xlane.xlu0 %2021
          %v2023 = vsel %vm2004, %v1991, -inf
          %2024 = vmax.xlane.f32.xlu0 %v2023
          %v2025 = vpop.xlane.xlu0 %2024
          %v2026 = vsel %vm2004, %v1994, -inf
          %2027 = vmax.xlane.f32.xlu0 %v2026
          %v2028 = vpop.xlane.xlu0 %2027
          %v2029 = vmax.f32 %v1996, %v2007
          %v2030 = vmax.f32 %v1997, %v2010
          %v2031 = vmax.f32 %v1998, %v2013
          %v2032 = vmax.f32 %v1999, %v2016
          %v2033 = vmax.f32 %v2000, %v2019
          %v2034 = vmax.f32 %v2001, %v2022
          %v2035 = vmax.f32 %v2002, %v2025
          %v2036 = vmax.f32 %v2003, %v2028
          %v2037 = vsub.f32 %v1996, %v2029
          %v2038 = vsub.f32 %v1997, %v2030
          %v2039 = vsub.f32 %v1998, %v2031
          %v2040 = vsub.f32 %v1999, %v2032
          %v2041 = vsub.f32 %v2000, %v2033
          %v2042 = vsub.f32 %v2001, %v2034
          %v2043 = vsub.f32 %v2002, %v2035
          %v2044 = vsub.f32 %v2003, %v2036
          %v2045 = vmul.f32 %v2037, 1.442695
          %v2046 = vpow.pop %v2045
          %v2047 = vmul.f32 %v2038, 1.442695
          %v2048 = vpow.pop %v2047
          %v2049 = vmul.f32 %v2039, 1.442695
          %v2050 = vpow.pop %v2049
          %v2051 = vmul.f32 %v2040, 1.442695
          %v2052 = vpow.pop %v2051
          %v2053 = vmul.f32 %v2041, 1.442695
          %v2054 = vpow.pop %v2053
          %v2055 = vmul.f32 %v2042, 1.442695
          %v2056 = vpow.pop %v2055
          %v2057 = vmul.f32 %v2043, 1.442695
          %v2058 = vpow.pop %v2057
          %v2059 = vmul.f32 %v2044, 1.442695
          %v2060 = vpow.pop %v2059
          %2062 = vset.pattern.permute.xlu0 0
          %2063 = vperm.xlu0 %2062, %v2029
          %v2064 = vpop.permute.xlu0 %2063
          %2067 = vset.pattern.permute.xlu0 0
          %2068 = vperm.xlu0 %2067, %v2030
          %v2069 = vpop.permute.xlu0 %2068
          %2072 = vset.pattern.permute.xlu0 0
          %2073 = vperm.xlu0 %2072, %v2031
          %v2074 = vpop.permute.xlu0 %2073
          %2077 = vset.pattern.permute.xlu0 0
          %2078 = vperm.xlu0 %2077, %v2032
          %v2079 = vpop.permute.xlu0 %2078
          %2082 = vset.pattern.permute.xlu0 0
          %2083 = vperm.xlu0 %2082, %v2033
          %v2084 = vpop.permute.xlu0 %2083
          %2087 = vset.pattern.permute.xlu0 0
          %2088 = vperm.xlu0 %2087, %v2034
          %v2089 = vpop.permute.xlu0 %2088
          %2092 = vset.pattern.permute.xlu0 0
          %2093 = vperm.xlu0 %2092, %v2035
          %v2094 = vpop.permute.xlu0 %2093
          %2097 = vset.pattern.permute.xlu0 0
          %2098 = vperm.xlu0 %2097, %v2036
          %v2099 = vpop.permute.xlu0 %2098
          %v2101 = vsub.f32 %v1886, %v2064
          %v2102 = vsub.f32 %v1889, %v2069
          %v2103 = vsub.f32 %v1921, %v2074
          %v2104 = vsub.f32 %v1924, %v2079
          %v2105 = vsub.f32 %v1956, %v2084
          %v2106 = vsub.f32 %v1959, %v2089
          %v2107 = vsub.f32 %v1991, %v2094
          %v2108 = vsub.f32 %v1994, %v2099
          %v2109 = vmul.f32 %v2101, 1.442695
          %v2110 = vpow.pop %v2109
          %v2111 = vmul.f32 %v2102, 1.442695
          %v2112 = vpow.pop %v2111
          %v2113 = vmul.f32 %v2103, 1.442695
          %v2114 = vpow.pop %v2113
          %v2115 = vmul.f32 %v2104, 1.442695
          %v2116 = vpow.pop %v2115
          %v2117 = vmul.f32 %v2105, 1.442695
          %v2118 = vpow.pop %v2117
          %v2119 = vmul.f32 %v2106, 1.442695
          %v2120 = vpow.pop %v2119
          %v2121 = vmul.f32 %v2107, 1.442695
          %v2122 = vpow.pop %v2121
          %v2123 = vmul.f32 %v2108, 1.442695
          %v2124 = vpow.pop %v2123
          %v2125 = vld [vmem:[#allocation5] sm:$0xff]
          %v2126 = vld [vmem:[#allocation5 + $0x8] sm:$0xff]
          %v2127 = vld [vmem:[#allocation5 + $0x10] sm:$0xff]
          %v2128 = vld [vmem:[#allocation5 + $0x18] sm:$0xff]
          %v2129 = vld [vmem:[#allocation5 + $0x20] sm:$0xff]
          %v2130 = vld [vmem:[#allocation5 + $0x28] sm:$0xff]
          %v2131 = vld [vmem:[#allocation5 + $0x30] sm:$0xff]
          %v2132 = vld [vmem:[#allocation5 + $0x38] sm:$0xff]
          %v2133 = vmul.f32 %v2046, %v2125
          %v2134 = vmul.f32 %v2048, %v2126
          %v2135 = vmul.f32 %v2050, %v2127
          %v2136 = vmul.f32 %v2052, %v2128
          %v2137 = vmul.f32 %v2054, %v2129
          %v2138 = vmul.f32 %v2056, %v2130
          %v2139 = vmul.f32 %v2058, %v2131
          %v2140 = vmul.f32 %v2060, %v2132
          %v2141 = vsel %vm2004, %v2110, 0.0
          %2142 = vadd.xlane.f32.xlu0 %v2141
          %v2143 = vpop.xlane.xlu0 %2142
          %v2144 = vsel %vm2004, %v2112, 0.0
          %2145 = vadd.xlane.f32.xlu0 %v2144
          %v2146 = vpop.xlane.xlu0 %2145
          %v2147 = vsel %vm2004, %v2114, 0.0
          %2148 = vadd.xlane.f32.xlu0 %v2147
          %v2149 = vpop.xlane.xlu0 %2148
          %v2150 = vsel %vm2004, %v2116, 0.0
          %2151 = vadd.xlane.f32.xlu0 %v2150
          %v2152 = vpop.xlane.xlu0 %2151
          %v2153 = vsel %vm2004, %v2118, 0.0
          %2154 = vadd.xlane.f32.xlu0 %v2153
          %v2155 = vpop.xlane.xlu0 %2154
          %v2156 = vsel %vm2004, %v2120, 0.0
          %2157 = vadd.xlane.f32.xlu0 %v2156
          %v2158 = vpop.xlane.xlu0 %2157
          %v2159 = vsel %vm2004, %v2122, 0.0
          %2160 = vadd.xlane.f32.xlu0 %v2159
          %v2161 = vpop.xlane.xlu0 %2160
          %v2162 = vsel %vm2004, %v2124, 0.0
          %2163 = vadd.xlane.f32.xlu0 %v2162
          %v2164 = vpop.xlane.xlu0 %2163
          %v2165 = vadd.f32 %v2133, %v2143
          %v2166 = vadd.f32 %v2134, %v2146
          %v2167 = vadd.f32 %v2135, %v2149
          %v2168 = vadd.f32 %v2136, %v2152
          %v2169 = vadd.f32 %v2137, %v2155
          %v2170 = vadd.f32 %v2138, %v2158
          %v2171 = vadd.f32 %v2139, %v2161
          %v2172 = vadd.f32 %v2140, %v2164
          %2173 = vst.msk [vmem:[#allocation5] sm:$0xff] %vm1805, %v2165
          %2174 = vst.msk [vmem:[#allocation5 + $0x8] sm:$0xff] %vm1805, %v2166
          %2175 = vst.msk [vmem:[#allocation5 + $0x10] sm:$0xff] %vm1805, %v2167
          %2176 = vst.msk [vmem:[#allocation5 + $0x18] sm:$0xff] %vm1805, %v2168
          %2177 = vst.msk [vmem:[#allocation5 + $0x20] sm:$0xff] %vm1805, %v2169
          %2178 = vst.msk [vmem:[#allocation5 + $0x28] sm:$0xff] %vm1805, %v2170
          %2179 = vst.msk [vmem:[#allocation5 + $0x30] sm:$0xff] %vm1805, %v2171
          %2180 = vst.msk [vmem:[#allocation5 + $0x38] sm:$0xff] %vm1805, %v2172
          %v2181 = vld [vmem:[#allocation6] sm:$0xff]
          %v2182 = vld [vmem:[#allocation6 + $0x8] sm:$0xff]
          %v2183 = vld [vmem:[#allocation6 + $0x10] sm:$0xff]
          %v2184 = vld [vmem:[#allocation6 + $0x18] sm:$0xff]
          %v2185 = vld [vmem:[#allocation6 + $0x20] sm:$0xff]
          %v2186 = vld [vmem:[#allocation6 + $0x28] sm:$0xff]
          %v2187 = vld [vmem:[#allocation6 + $0x30] sm:$0xff]
          %v2188 = vld [vmem:[#allocation6 + $0x38] sm:$0xff]
          %2190 = vset.pattern.permute.xlu0 0
          %2191 = vperm.xlu0 %2190, %v2046
          %v2192 = vpop.permute.xlu0 %2191
          %2195 = vset.pattern.permute.xlu0 0
          %2196 = vperm.xlu0 %2195, %v2048
          %v2197 = vpop.permute.xlu0 %2196
          %2200 = vset.pattern.permute.xlu0 0
          %2201 = vperm.xlu0 %2200, %v2050
          %v2202 = vpop.permute.xlu0 %2201
          %2205 = vset.pattern.permute.xlu0 0
          %2206 = vperm.xlu0 %2205, %v2052
          %v2207 = vpop.permute.xlu0 %2206
          %2210 = vset.pattern.permute.xlu0 0
          %2211 = vperm.xlu0 %2210, %v2054
          %v2212 = vpop.permute.xlu0 %2211
          %2215 = vset.pattern.permute.xlu0 0
          %2216 = vperm.xlu0 %2215, %v2056
          %v2217 = vpop.permute.xlu0 %2216
          %2220 = vset.pattern.permute.xlu0 0
          %2221 = vperm.xlu0 %2220, %v2058
          %v2222 = vpop.permute.xlu0 %2221
          %2225 = vset.pattern.permute.xlu0 0
          %2226 = vperm.xlu0 %2225, %v2060
          %v2227 = vpop.permute.xlu0 %2226
          %v2229 = vmul.f32 %v2192, %v2181
          %v2230 = vmul.f32 %v2197, %v2182
          %v2231 = vmul.f32 %v2202, %v2183
          %v2232 = vmul.f32 %v2207, %v2184
          %v2233 = vmul.f32 %v2212, %v2185
          %v2234 = vmul.f32 %v2217, %v2186
          %v2235 = vmul.f32 %v2222, %v2187
          %v2236 = vmul.f32 %v2227, %v2188
          %v2238 = vsel %vm2004, %v2110, 0
          %v2241 = vsel %vm2004, %v2112, 0
          %2243 = vmatpush.msra.mxu0 0.0
          %2244 = vmatpush.msra.mxu0 0.0
          %2245 = vmatpush.msra.mxu0 0.0
          %2246 = vmatpush.msra.mxu0 0.0
          %2247 = vmatpush.msra.mxu0 0.0
          %2248 = vmatpush.msra.mxu0 0.0
          %2249 = vmatpush.msra.mxu0 0.0
          %2250 = vmatpush.msra.mxu0 0.0
          %2251 = vmatpush.msra.mxu0 0.0
          %2252 = vmatpush.msra.mxu0 0.0
          %2253 = vmatpush.msra.mxu0 0.0
          %2254 = vmatpush.msra.mxu0 0.0
          %2255 = vmatpush.msra.mxu0 0.0
          %2256 = vmatpush.msra.mxu0 0.0
          %2257 = vmatpush.msra.mxu0 %v1849
          %2258 = vmatpush.msra.mxu0 %v1848
          %2259 = vmatmul.f32.gmra.mxu0 %v2238
          %v2260 = vpop.f32.mrf.mxu0
          %v2261 = vadd.f32 0.0, %v2260
          %2262 = vmatmul.f32.gmra.mxu0 %v2241
          %v2263 = vpop.f32.mrf.mxu0
          %v2264 = vadd.f32 0.0, %v2263
          %2265 = vdwg.mxu0
          %v2267 = vsel %vm2004, %v2114, 0
          %v2270 = vsel %vm2004, %v2116, 0
          %2272 = vmatpush.msra.mxu0 0.0
          %2273 = vmatpush.msra.mxu0 0.0
          %2274 = vmatpush.msra.mxu0 0.0
          %2275 = vmatpush.msra.mxu0 0.0
          %2276 = vmatpush.msra.mxu0 0.0
          %2277 = vmatpush.msra.mxu0 0.0
          %2278 = vmatpush.msra.mxu0 0.0
          %2279 = vmatpush.msra.mxu0 0.0
          %2280 = vmatpush.msra.mxu0 0.0
          %2281 = vmatpush.msra.mxu0 0.0
          %2282 = vmatpush.msra.mxu0 0.0
          %2283 = vmatpush.msra.mxu0 0.0
          %2284 = vmatpush.msra.mxu0 0.0
          %2285 = vmatpush.msra.mxu0 0.0
          %2286 = vmatpush.msra.mxu0 %v1851
          %2287 = vmatpush.msra.mxu0 %v1850
          %2288 = vmatmul.f32.gmra.mxu0 %v2267
          %v2289 = vpop.f32.mrf.mxu0
          %v2290 = vadd.f32 0.0, %v2289
          %2291 = vmatmul.f32.gmra.mxu0 %v2270
          %v2292 = vpop.f32.mrf.mxu0
          %v2293 = vadd.f32 0.0, %v2292
          %2294 = vdwg.mxu0
          %v2296 = vsel %vm2004, %v2118, 0
          %v2299 = vsel %vm2004, %v2120, 0
          %2301 = vmatpush.msra.mxu0 0.0
          %2302 = vmatpush.msra.mxu0 0.0
          %2303 = vmatpush.msra.mxu0 0.0
          %2304 = vmatpush.msra.mxu0 0.0
          %2305 = vmatpush.msra.mxu0 0.0
          %2306 = vmatpush.msra.mxu0 0.0
          %2307 = vmatpush.msra.mxu0 0.0
          %2308 = vmatpush.msra.mxu0 0.0
          %2309 = vmatpush.msra.mxu0 0.0
          %2310 = vmatpush.msra.mxu0 0.0
          %2311 = vmatpush.msra.mxu0 0.0
          %2312 = vmatpush.msra.mxu0 0.0
          %2313 = vmatpush.msra.mxu0 0.0
          %2314 = vmatpush.msra.mxu0 0.0
          %2315 = vmatpush.msra.mxu0 %v1853
          %2316 = vmatpush.msra.mxu0 %v1852
          %2317 = vmatmul.f32.gmra.mxu0 %v2296
          %v2318 = vpop.f32.mrf.mxu0
          %v2319 = vadd.f32 0.0, %v2318
          %2320 = vmatmul.f32.gmra.mxu0 %v2299
          %v2321 = vpop.f32.mrf.mxu0
          %v2322 = vadd.f32 0.0, %v2321
          %2323 = vdwg.mxu0
          %v2325 = vsel %vm2004, %v2122, 0
          %v2328 = vsel %vm2004, %v2124, 0
          %2330 = vmatpush.msra.mxu0 0.0
          %2331 = vmatpush.msra.mxu0 0.0
          %2332 = vmatpush.msra.mxu0 0.0
          %2333 = vmatpush.msra.mxu0 0.0
          %2334 = vmatpush.msra.mxu0 0.0
          %2335 = vmatpush.msra.mxu0 0.0
          %2336 = vmatpush.msra.mxu0 0.0
          %2337 = vmatpush.msra.mxu0 0.0
          %2338 = vmatpush.msra.mxu0 0.0
          %2339 = vmatpush.msra.mxu0 0.0
          %2340 = vmatpush.msra.mxu0 0.0
          %2341 = vmatpush.msra.mxu0 0.0
          %2342 = vmatpush.msra.mxu0 0.0
          %2343 = vmatpush.msra.mxu0 0.0
          %2344 = vmatpush.msra.mxu0 %v1855
          %2345 = vmatpush.msra.mxu0 %v1854
          %2346 = vmatmul.f32.gmra.mxu0 %v2325
          %v2347 = vpop.f32.mrf.mxu0
          %v2348 = vadd.f32 0.0, %v2347
          %2349 = vmatmul.f32.gmra.mxu0 %v2328
          %v2350 = vpop.f32.mrf.mxu0
          %v2351 = vadd.f32 0.0, %v2350
          %2352 = vdwg.mxu0
          %v2353 = vadd.f32 %v2229, %v2261
          %v2354 = vadd.f32 %v2230, %v2264
          %v2355 = vadd.f32 %v2231, %v2290
          %v2356 = vadd.f32 %v2232, %v2293
          %v2357 = vadd.f32 %v2233, %v2319
          %v2358 = vadd.f32 %v2234, %v2322
          %v2359 = vadd.f32 %v2235, %v2348
          %v2360 = vadd.f32 %v2236, %v2351
          %2361 = vst.msk [vmem:[#allocation6] sm:$0xff] %vm1822, %v2353
          %2362 = vst.msk [vmem:[#allocation6 + $0x8] sm:$0xff] %vm1822, %v2354
          %2363 = vst.msk [vmem:[#allocation6 + $0x10] sm:$0xff] %vm1822, %v2355
          %2364 = vst.msk [vmem:[#allocation6 + $0x18] sm:$0xff] %vm1822, %v2356
          %2365 = vst.msk [vmem:[#allocation6 + $0x20] sm:$0xff] %vm1822, %v2357
          %2366 = vst.msk [vmem:[#allocation6 + $0x28] sm:$0xff] %vm1822, %v2358
          %2367 = vst.msk [vmem:[#allocation6 + $0x30] sm:$0xff] %vm1822, %v2359
          %2368 = vst.msk [vmem:[#allocation6 + $0x38] sm:$0xff] %vm1822, %v2360
          %2369 = vst.msk [vmem:[#allocation4] sm:$0xff] %vm1805, %v2029
          %2370 = vst.msk [vmem:[#allocation4 + $0x8] sm:$0xff] %vm1805, %v2030
          %2371 = vst.msk [vmem:[#allocation4 + $0x10] sm:$0xff] %vm1805, %v2031
          %2372 = vst.msk [vmem:[#allocation4 + $0x18] sm:$0xff] %vm1805, %v2032
          %2373 = vst.msk [vmem:[#allocation4 + $0x20] sm:$0xff] %vm1805, %v2033
          %2374 = vst.msk [vmem:[#allocation4 + $0x28] sm:$0xff] %vm1805, %v2034
          %2375 = vst.msk [vmem:[#allocation4 + $0x30] sm:$0xff] %vm1805, %v2035
          %2376 = vst.msk [vmem:[#allocation4 + $0x38] sm:$0xff] %vm1805, %v2036
        $region85: #{tpu_custom_call.1} parent=55 // loop_footer
          %s1836 = sadd.s32 1, %s1832
        $region86: #{tpu_custom_call.1} parent=55 // loop_footer_branch
          %1831 = sbr.rel target = $region82
        $region87: #{tpu_custom_call.1} parent=55 // loop_exit
          _
        %v2377 = vld [vmem:[#allocation6] sm:$0xff]
        %v2378 = vld [vmem:[#allocation6 + $0x8] sm:$0xff]
        %v2379 = vld [vmem:[#allocation6 + $0x10] sm:$0xff]
        %v2380 = vld [vmem:[#allocation6 + $0x18] sm:$0xff]
        %v2381 = vld [vmem:[#allocation6 + $0x20] sm:$0xff]
        %v2382 = vld [vmem:[#allocation6 + $0x28] sm:$0xff]
        %v2383 = vld [vmem:[#allocation6 + $0x30] sm:$0xff]
        %v2384 = vld [vmem:[#allocation6 + $0x38] sm:$0xff]
        %v2385 = vld [vmem:[#allocation5] sm:$0xff]
        %v2386 = vld [vmem:[#allocation5 + $0x8] sm:$0xff]
        %v2387 = vld [vmem:[#allocation5 + $0x10] sm:$0xff]
        %v2388 = vld [vmem:[#allocation5 + $0x18] sm:$0xff]
        %v2389 = vld [vmem:[#allocation5 + $0x20] sm:$0xff]
        %v2390 = vld [vmem:[#allocation5 + $0x28] sm:$0xff]
        %v2391 = vld [vmem:[#allocation5 + $0x30] sm:$0xff]
        %v2392 = vld [vmem:[#allocation5 + $0x38] sm:$0xff]
        %v2393 = vrcp.pop %v2385
        %v2394 = vmul.f32 %v2385, %v2393
        %v2395 = vsub.f32 1.0, %v2394
        %v2396 = vmul.f32 %v2393, %v2395
        %v2397 = vadd.f32 %v2393, %v2396
        %vm2398 = vweird.f32 %v2385
        %vm2399 = vweird.f32 %v2393
        %vm2400 = vmor %vm2398, %vm2399
        %v2401 = vsel %vm2400, %v2393, %v2397
        %v2402 = vand.u32 2147483647, %v2385
        %vm2403 = vcmp.eq.f32.partialorder %v2402, 8.507059e+37
        %v2404 = vand.u32 %v2385, 2147483648
        %v2405 = vor.u32 1.1754944e-38, %v2404
        %v2406 = vsel %vm2403, %v2405, %v2401
        %v2407 = vrcp.pop %v2386
        %v2408 = vmul.f32 %v2386, %v2407
        %v2409 = vsub.f32 1.0, %v2408
        %v2410 = vmul.f32 %v2407, %v2409
        %v2411 = vadd.f32 %v2407, %v2410
        %vm2412 = vweird.f32 %v2386
        %vm2413 = vweird.f32 %v2407
        %vm2414 = vmor %vm2412, %vm2413
        %v2415 = vsel %vm2414, %v2407, %v2411
        %v2416 = vand.u32 2147483647, %v2386
        %vm2417 = vcmp.eq.f32.partialorder %v2416, 8.507059e+37
        %v2418 = vand.u32 %v2386, 2147483648
        %v2419 = vor.u32 1.1754944e-38, %v2418
        %v2420 = vsel %vm2417, %v2419, %v2415
        %v2421 = vrcp.pop %v2387
        %v2422 = vmul.f32 %v2387, %v2421
        %v2423 = vsub.f32 1.0, %v2422
        %v2424 = vmul.f32 %v2421, %v2423
        %v2425 = vadd.f32 %v2421, %v2424
        %vm2426 = vweird.f32 %v2387
        %vm2427 = vweird.f32 %v2421
        %vm2428 = vmor %vm2426, %vm2427
        %v2429 = vsel %vm2428, %v2421, %v2425
        %v2430 = vand.u32 2147483647, %v2387
        %vm2431 = vcmp.eq.f32.partialorder %v2430, 8.507059e+37
        %v2432 = vand.u32 %v2387, 2147483648
        %v2433 = vor.u32 1.1754944e-38, %v2432
        %v2434 = vsel %vm2431, %v2433, %v2429
        %v2435 = vrcp.pop %v2388
        %v2436 = vmul.f32 %v2388, %v2435
        %v2437 = vsub.f32 1.0, %v2436
        %v2438 = vmul.f32 %v2435, %v2437
        %v2439 = vadd.f32 %v2435, %v2438
        %vm2440 = vweird.f32 %v2388
        %vm2441 = vweird.f32 %v2435
        %vm2442 = vmor %vm2440, %vm2441
        %v2443 = vsel %vm2442, %v2435, %v2439
        %v2444 = vand.u32 2147483647, %v2388
        %vm2445 = vcmp.eq.f32.partialorder %v2444, 8.507059e+37
        %v2446 = vand.u32 %v2388, 2147483648
        %v2447 = vor.u32 1.1754944e-38, %v2446
        %v2448 = vsel %vm2445, %v2447, %v2443
        %v2449 = vrcp.pop %v2389
        %v2450 = vmul.f32 %v2389, %v2449
        %v2451 = vsub.f32 1.0, %v2450
        %v2452 = vmul.f32 %v2449, %v2451
        %v2453 = vadd.f32 %v2449, %v2452
        %vm2454 = vweird.f32 %v2389
        %vm2455 = vweird.f32 %v2449
        %vm2456 = vmor %vm2454, %vm2455
        %v2457 = vsel %vm2456, %v2449, %v2453
        %v2458 = vand.u32 2147483647, %v2389
        %vm2459 = vcmp.eq.f32.partialorder %v2458, 8.507059e+37
        %v2460 = vand.u32 %v2389, 2147483648
        %v2461 = vor.u32 1.1754944e-38, %v2460
        %v2462 = vsel %vm2459, %v2461, %v2457
        %v2463 = vrcp.pop %v2390
        %v2464 = vmul.f32 %v2390, %v2463
        %v2465 = vsub.f32 1.0, %v2464
        %v2466 = vmul.f32 %v2463, %v2465
        %v2467 = vadd.f32 %v2463, %v2466
        %vm2468 = vweird.f32 %v2390
        %vm2469 = vweird.f32 %v2463
        %vm2470 = vmor %vm2468, %vm2469
        %v2471 = vsel %vm2470, %v2463, %v2467
        %v2472 = vand.u32 2147483647, %v2390
        %vm2473 = vcmp.eq.f32.partialorder %v2472, 8.507059e+37
        %v2474 = vand.u32 %v2390, 2147483648
        %v2475 = vor.u32 1.1754944e-38, %v2474
        %v2476 = vsel %vm2473, %v2475, %v2471
        %v2477 = vrcp.pop %v2391
        %v2478 = vmul.f32 %v2391, %v2477
        %v2479 = vsub.f32 1.0, %v2478
        %v2480 = vmul.f32 %v2477, %v2479
        %v2481 = vadd.f32 %v2477, %v2480
        %vm2482 = vweird.f32 %v2391
        %vm2483 = vweird.f32 %v2477
        %vm2484 = vmor %vm2482, %vm2483
        %v2485 = vsel %vm2484, %v2477, %v2481
        %v2486 = vand.u32 2147483647, %v2391
        %vm2487 = vcmp.eq.f32.partialorder %v2486, 8.507059e+37
        %v2488 = vand.u32 %v2391, 2147483648
        %v2489 = vor.u32 1.1754944e-38, %v2488
        %v2490 = vsel %vm2487, %v2489, %v2485
        %v2491 = vrcp.pop %v2392
        %v2492 = vmul.f32 %v2392, %v2491
        %v2493 = vsub.f32 1.0, %v2492
        %v2494 = vmul.f32 %v2491, %v2493
        %v2495 = vadd.f32 %v2491, %v2494
        %vm2496 = vweird.f32 %v2392
        %vm2497 = vweird.f32 %v2491
        %vm2498 = vmor %vm2496, %vm2497
        %v2499 = vsel %vm2498, %v2491, %v2495
        %v2500 = vand.u32 2147483647, %v2392
        %vm2501 = vcmp.eq.f32.partialorder %v2500, 8.507059e+37
        %v2502 = vand.u32 %v2392, 2147483648
        %v2503 = vor.u32 1.1754944e-38, %v2502
        %v2504 = vsel %vm2501, %v2503, %v2499
        %2506 = vset.pattern.permute.xlu0 0
        %2507 = vperm.xlu0 %2506, %v2406
        %v2508 = vpop.permute.xlu0 %2507
        %2511 = vset.pattern.permute.xlu0 0
        %2512 = vperm.xlu0 %2511, %v2420
        %v2513 = vpop.permute.xlu0 %2512
        %2516 = vset.pattern.permute.xlu0 0
        %2517 = vperm.xlu0 %2516, %v2434
        %v2518 = vpop.permute.xlu0 %2517
        %2521 = vset.pattern.permute.xlu0 0
        %2522 = vperm.xlu0 %2521, %v2448
        %v2523 = vpop.permute.xlu0 %2522
        %2526 = vset.pattern.permute.xlu0 0
        %2527 = vperm.xlu0 %2526, %v2462
        %v2528 = vpop.permute.xlu0 %2527
        %2531 = vset.pattern.permute.xlu0 0
        %2532 = vperm.xlu0 %2531, %v2476
        %v2533 = vpop.permute.xlu0 %2532
        %2536 = vset.pattern.permute.xlu0 0
        %2537 = vperm.xlu0 %2536, %v2490
        %v2538 = vpop.permute.xlu0 %2537
        %2541 = vset.pattern.permute.xlu0 0
        %2542 = vperm.xlu0 %2541, %v2504
        %v2543 = vpop.permute.xlu0 %2542
        %v2545 = vmul.f32 %v2377, %v2508
        %v2546 = vmul.f32 %v2378, %v2513
        %v2547 = vmul.f32 %v2379, %v2518
        %v2548 = vmul.f32 %v2380, %v2523
        %v2549 = vmul.f32 %v2381, %v2528
        %v2550 = vmul.f32 %v2382, %v2533
        %v2551 = vmul.f32 %v2383, %v2538
        %v2552 = vmul.f32 %v2384, %v2543
        %v2553 = vrot.slane %v2549, 4
        %v2554 = vsel %vm1585, %v2553, %v2545
        %v2555 = vrot.slane %v2545, 4
        %v2556 = vsel %vm1585, %v2549, %v2555
        %v2558 = vunpack.c.l.s4 1983009808
        %v2559 = vunpack.c.0.s8 %v2558
        %v2560 = vperm.slane %v2554, %v2559
        %v2562 = vunpack.c.l.s4 1983009808
        %v2563 = vunpack.c.0.s8 %v2562
        %v2564 = vperm.slane %v2556, %v2563
        %v2565 = vrot.slane %v2551, 4
        %v2566 = vsel %vm1585, %v2565, %v2547
        %v2567 = vrot.slane %v2547, 4
        %v2568 = vsel %vm1585, %v2551, %v2567
        %v2570 = vunpack.c.l.s4 1983009808
        %v2571 = vunpack.c.0.s8 %v2570
        %v2572 = vperm.slane %v2566, %v2571
        %v2574 = vunpack.c.l.s4 1983009808
        %v2575 = vunpack.c.0.s8 %v2574
        %v2576 = vperm.slane %v2568, %v2575
        %v2577 = vrot.slane %v2572, 4
        %v2578 = vsel %vm1585, %v2577, %v2560
        %v2579 = vrot.slane %v2560, 4
        %v2580 = vsel %vm1585, %v2572, %v2579
        %v2582 = vunpack.c.l.s4 1934713408
        %v2583 = vunpack.c.0.s8 %v2582
        %v2584 = vperm.slane %v2578, %v2583
        %v2586 = vunpack.c.l.s4 1934713408
        %v2587 = vunpack.c.0.s8 %v2586
        %v2588 = vperm.slane %v2580, %v2587
        %v2589 = vrot.slane %v2576, 4
        %v2590 = vsel %vm1585, %v2589, %v2564
        %v2591 = vrot.slane %v2564, 4
        %v2592 = vsel %vm1585, %v2576, %v2591
        %v2594 = vunpack.c.l.s4 1934713408
        %v2595 = vunpack.c.0.s8 %v2594
        %v2596 = vperm.slane %v2590, %v2595
        %v2598 = vunpack.c.l.s4 1934713408
        %v2599 = vunpack.c.0.s8 %v2598
        %v2600 = vperm.slane %v2592, %v2599
        %v2601 = vrot.slane %v2584, 4
        %v2602 = vsel %vm1585, 0.0, %v2601
        %v2603 = vrot.slane %v2588, 4
        %v2604 = vsel %vm1585, 0.0, %v2603
        %v2605 = vrot.slane %v2596, 4
        %v2606 = vsel %vm1585, 0.0, %v2605
        %v2607 = vrot.slane %v2600, 4
        %v2608 = vsel %vm1585, 0.0, %v2607
        %v2609 = vrot.slane %v2550, 4
        %v2610 = vsel %vm1585, %v2609, %v2546
        %v2611 = vrot.slane %v2546, 4
        %v2612 = vsel %vm1585, %v2550, %v2611
        %v2614 = vunpack.c.l.s4 1983009808
        %v2615 = vunpack.c.0.s8 %v2614
        %v2616 = vperm.slane %v2610, %v2615
        %v2618 = vunpack.c.l.s4 1983009808
        %v2619 = vunpack.c.0.s8 %v2618
        %v2620 = vperm.slane %v2612, %v2619
        %v2621 = vrot.slane %v2552, 4
        %v2622 = vsel %vm1585, %v2621, %v2548
        %v2623 = vrot.slane %v2548, 4
        %v2624 = vsel %vm1585, %v2552, %v2623
        %v2626 = vunpack.c.l.s4 1983009808
        %v2627 = vunpack.c.0.s8 %v2626
        %v2628 = vperm.slane %v2622, %v2627
        %v2630 = vunpack.c.l.s4 1983009808
        %v2631 = vunpack.c.0.s8 %v2630
        %v2632 = vperm.slane %v2624, %v2631
        %v2633 = vrot.slane %v2628, 4
        %v2634 = vsel %vm1585, %v2633, %v2616
        %v2635 = vrot.slane %v2616, 4
        %v2636 = vsel %vm1585, %v2628, %v2635
        %v2638 = vunpack.c.l.s4 1934713408
        %v2639 = vunpack.c.0.s8 %v2638
        %v2640 = vperm.slane %v2634, %v2639
        %v2642 = vunpack.c.l.s4 1934713408
        %v2643 = vunpack.c.0.s8 %v2642
        %v2644 = vperm.slane %v2636, %v2643
        %v2645 = vrot.slane %v2632, 4
        %v2646 = vsel %vm1585, %v2645, %v2620
        %v2647 = vrot.slane %v2620, 4
        %v2648 = vsel %vm1585, %v2632, %v2647
        %v2650 = vunpack.c.l.s4 1934713408
        %v2651 = vunpack.c.0.s8 %v2650
        %v2652 = vperm.slane %v2646, %v2651
        %v2654 = vunpack.c.l.s4 1934713408
        %v2655 = vunpack.c.0.s8 %v2654
        %v2656 = vperm.slane %v2648, %v2655
        %v2657 = vrot.slane %v2640, 4
        %v2658 = vsel %vm1585, 0.0, %v2657
        %v2659 = vrot.slane %v2644, 4
        %v2660 = vsel %vm1585, 0.0, %v2659
        %v2661 = vrot.slane %v2652, 4
        %v2662 = vsel %vm1585, 0.0, %v2661
        %v2663 = vrot.slane %v2656, 4
        %v2664 = vsel %vm1585, 0.0, %v2663
        %v2665 = vsel %vm1585, %v2603, %v2584
        %v2667 = vunpack.c.l.s4 1983009808
        %v2668 = vunpack.c.0.s8 %v2667
        %v2669 = vperm.slane %v2665, %v2668
        %v2670 = vrot.slane %v2604, 4
        %v2671 = vsel %vm1585, %v2670, %v2602
        %v2673 = vunpack.c.l.s4 1983009808
        %v2674 = vunpack.c.0.s8 %v2673
        %v2675 = vperm.slane %v2671, %v2674
        %v2676 = vsel %vm1585, %v2607, %v2596
        %v2678 = vunpack.c.l.s4 1983009808
        %v2679 = vunpack.c.0.s8 %v2678
        %v2680 = vperm.slane %v2676, %v2679
        %v2681 = vrot.slane %v2608, 4
        %v2682 = vsel %vm1585, %v2681, %v2606
        %v2684 = vunpack.c.l.s4 1983009808
        %v2685 = vunpack.c.0.s8 %v2684
        %v2686 = vperm.slane %v2682, %v2685
        %v2687 = vrot.slane %v2675, 4
        %v2688 = vsel %vm1585, %v2687, %v2669
        %v2689 = vrot.slane %v2669, 4
        %v2690 = vsel %vm1585, %v2675, %v2689
        %v2692 = vunpack.c.l.s4 1934713408
        %v2693 = vunpack.c.0.s8 %v2692
        %v2694 = vperm.slane %v2688, %v2693
        %v2696 = vunpack.c.l.s4 1934713408
        %v2697 = vunpack.c.0.s8 %v2696
        %v2698 = vperm.slane %v2690, %v2697
        %v2699 = vrot.slane %v2686, 4
        %v2700 = vsel %vm1585, %v2699, %v2680
        %v2701 = vrot.slane %v2680, 4
        %v2702 = vsel %vm1585, %v2686, %v2701
        %v2704 = vunpack.c.l.s4 1934713408
        %v2705 = vunpack.c.0.s8 %v2704
        %v2706 = vperm.slane %v2700, %v2705
        %v2708 = vunpack.c.l.s4 1934713408
        %v2709 = vunpack.c.0.s8 %v2708
        %v2710 = vperm.slane %v2702, %v2709
        %v2711 = vrot.slane %v2706, 4
        %v2712 = vsel %vm1585, %v2711, %v2694
        %v2713 = vrot.slane %v2694, 4
        %v2714 = vsel %vm1585, %v2706, %v2713
        %v2715 = vrot.slane %v2710, 4
        %v2716 = vsel %vm1585, %v2715, %v2698
        %v2717 = vrot.slane %v2698, 4
        %v2718 = vsel %vm1585, %v2710, %v2717
        %v2719 = vsel %vm1585, %v2659, %v2640
        %v2721 = vunpack.c.l.s4 1983009808
        %v2722 = vunpack.c.0.s8 %v2721
        %v2723 = vperm.slane %v2719, %v2722
        %v2724 = vrot.slane %v2660, 4
        %v2725 = vsel %vm1585, %v2724, %v2658
        %v2727 = vunpack.c.l.s4 1983009808
        %v2728 = vunpack.c.0.s8 %v2727
        %v2729 = vperm.slane %v2725, %v2728
        %v2730 = vsel %vm1585, %v2663, %v2652
        %v2732 = vunpack.c.l.s4 1983009808
        %v2733 = vunpack.c.0.s8 %v2732
        %v2734 = vperm.slane %v2730, %v2733
        %v2735 = vrot.slane %v2664, 4
        %v2736 = vsel %vm1585, %v2735, %v2662
        %v2738 = vunpack.c.l.s4 1983009808
        %v2739 = vunpack.c.0.s8 %v2738
        %v2740 = vperm.slane %v2736, %v2739
        %v2741 = vrot.slane %v2729, 4
        %v2742 = vsel %vm1585, %v2741, %v2723
        %v2743 = vrot.slane %v2723, 4
        %v2744 = vsel %vm1585, %v2729, %v2743
        %v2746 = vunpack.c.l.s4 1934713408
        %v2747 = vunpack.c.0.s8 %v2746
        %v2748 = vperm.slane %v2742, %v2747
        %v2750 = vunpack.c.l.s4 1934713408
        %v2751 = vunpack.c.0.s8 %v2750
        %v2752 = vperm.slane %v2744, %v2751
        %v2753 = vrot.slane %v2740, 4
        %v2754 = vsel %vm1585, %v2753, %v2734
        %v2755 = vrot.slane %v2734, 4
        %v2756 = vsel %vm1585, %v2740, %v2755
        %v2758 = vunpack.c.l.s4 1934713408
        %v2759 = vunpack.c.0.s8 %v2758
        %v2760 = vperm.slane %v2754, %v2759
        %v2762 = vunpack.c.l.s4 1934713408
        %v2763 = vunpack.c.0.s8 %v2762
        %v2764 = vperm.slane %v2756, %v2763
        %v2765 = vrot.slane %v2760, 4
        %v2766 = vsel %vm1585, %v2765, %v2748
        %v2767 = vrot.slane %v2748, 4
        %v2768 = vsel %vm1585, %v2760, %v2767
        %v2769 = vrot.slane %v2764, 4
        %v2770 = vsel %vm1585, %v2769, %v2752
        %v2771 = vrot.slane %v2752, 4
        %v2772 = vsel %vm1585, %v2764, %v2771
        %2775 = vrot.lane.b32.xlu0 %v2714, 32
        %v2776 = vpop.permute.xlu0 %2775
        %2777 = vrot.lane.b32.xlu0 %v2768, 32
        %v2778 = vpop.permute.xlu0 %2777
        %2783 = vrot.lane.b32.xlu0 %v2716, 64
        %v2784 = vpop.permute.xlu0 %2783
        %2785 = vrot.lane.b32.xlu0 %v2770, 64
        %v2786 = vpop.permute.xlu0 %2785
        %2791 = vrot.lane.b32.xlu0 %v2718, 96
        %v2792 = vpop.permute.xlu0 %2791
        %2793 = vrot.lane.b32.xlu0 %v2772, 96
        %v2794 = vpop.permute.xlu0 %2793
        %v2797 = vsel %vm1822, %v2712, %v2776
        %v2798 = vsel %vm1822, %v2766, %v2778
        %vm2799 = vcmask 523264
        %v2800 = vsel %vm2799, %v2797, %v2784
        %v2801 = vsel %vm2799, %v2798, %v2786
        %vm2802 = vcmask 785408
        %v2803 = vsel %vm2802, %v2800, %v2792
        %v2804 = vsel %vm2802, %v2801, %v2794
        %v2805 = vld [vmem:[#allocation15] sm:$0xff]
        %v2806 = vld [vmem:[#allocation15 + $0x8] sm:$0xff]
        %v2807 = vld [vmem:[#allocation15 + $0x10] sm:$0xff]
        %v2808 = vld [vmem:[#allocation15 + $0x18] sm:$0xff]
        %v2809 = vld [vmem:[#allocation15 + $0x20] sm:$0xff]
        %v2810 = vld [vmem:[#allocation15 + $0x28] sm:$0xff]
        %v2811 = vld [vmem:[#allocation15 + $0x30] sm:$0xff]
        %v2812 = vld [vmem:[#allocation15 + $0x38] sm:$0xff]
        %v2813 = vld [vmem:[#allocation15 + $0x40] sm:$0xff]
        %v2814 = vld [vmem:[#allocation15 + $0x48] sm:$0xff]
        %v2815 = vld [vmem:[#allocation15 + $0x50] sm:$0xff]
        %v2816 = vld [vmem:[#allocation15 + $0x58] sm:$0xff]
        %v2817 = vld [vmem:[#allocation15 + $0x60] sm:$0xff]
        %v2818 = vld [vmem:[#allocation15 + $0x68] sm:$0xff]
        %v2819 = vld [vmem:[#allocation15 + $0x70] sm:$0xff]
        %v2820 = vld [vmem:[#allocation15 + $0x78] sm:$0xff]
        %v2821 = vld [vmem:[%s8] sm:$0x1]
        %v2823 = vperm.slane %v2821, 0
        %2825 = vmatpush.msra.mxu0 %v2820
        %2826 = vmatpush.msra.mxu0 %v2819
        %2827 = vmatpush.msra.mxu0 %v2818
        %2828 = vmatpush.msra.mxu0 %v2817
        %2829 = vmatpush.msra.mxu0 %v2816
        %2830 = vmatpush.msra.mxu0 %v2815
        %2831 = vmatpush.msra.mxu0 %v2814
        %2832 = vmatpush.msra.mxu0 %v2813
        %2833 = vmatpush.msra.mxu0 %v2812
        %2834 = vmatpush.msra.mxu0 %v2811
        %2835 = vmatpush.msra.mxu0 %v2810
        %2836 = vmatpush.msra.mxu0 %v2809
        %2837 = vmatpush.msra.mxu0 %v2808
        %2838 = vmatpush.msra.mxu0 %v2807
        %2839 = vmatpush.msra.mxu0 %v2806
        %2840 = vmatpush.msra.mxu0 %v2805
        %2841 = vmatmul.f32.gmra.mxu0 %v2803
        %v2842 = vpop.f32.mrf.mxu0
        %v2843 = vadd.f32 %v2823, %v2842
        %2844 = vmatmul.f32.gmra.mxu0 %v2804
        %v2845 = vpop.f32.mrf.mxu0
        %v2846 = vadd.f32 %v2823, %v2845
        %2847 = vdwg.mxu0
        %2848 = vst [vmem:[%s415] sm:$0xff] %v2843
        %2849 = vst [vmem:[%s415 + $0x8] sm:$0xff] %v2846
        %s2850 = sand.u32 %s242, 1
        %s2851 = scalar_lea.sflag [#allocation9], %s2850
        %s2852 = sand.u32 %s242, 1
        %s2853 = smul.addr %s2852, 16
        %s2854 = scalar_lea.vmem [#allocation16], %s2853
        // Predicated region
        $region88: #{tpu_custom_call.1} parent=55 // pred_check
          %p2855 = pneg %p252
        $region89: #{tpu_custom_call.1} parent=55 // pred_check_branch
          %2857 = sbr.rel (%p2855) target = $region91
        $region90: #{tpu_custom_call.1} parent=55 // pred_region
          %s2858 = smul.u32 2, %s31
          %2860 = vsyncadd %s2851, 0
          %s2861 = smul.addr %s30, 4
          %s2862 = sadd.s32 %s2858, %s2861
          %s2863 = smul.addr %s2862, 8
          %s2864 = scalar_lea.hbm %s9, %s2863
          %s2865 = sshll.u32 %s2854, 4
          %s2866 = int_to_ptr.vmem [resolvable:$true] %s2865
          %s2867 = sshll.u32 %s2864, 4
          %s2868 = int_to_ptr.hbm [resolvable:$true] %s2867
          %2873 = dma.vmem_to_hbm [thread:$0]  %s2866, 256, %s2868, %s2851, 128, 128, 8
        $region91: #{tpu_custom_call.1} parent=55 // pred_fallthru
          _
      $region56: #{tpu_custom_call.1} parent=5 // pred_fallthru
        _
      %p2874 = scmp.le.s32.totalorder 2, %s21
      // Predicated region
      $region92: #{tpu_custom_call.1} parent=5 // pred_check
        %p2875 = pneg %p2874
      $region93: #{tpu_custom_call.1} parent=5 // pred_check_branch
        %2877 = sbr.rel (%p2875) target = $region95
      $region94: #{tpu_custom_call.1} parent=5 // pred_region
        %s2878 = ssub.s32 %s21, 2
        // Predicated region
        $region96: #{tpu_custom_call.1} parent=94 // pred_check
          %p2879 = pneg %p258
        $region97: #{tpu_custom_call.1} parent=94 // pred_check_branch
          %2881 = sbr.rel (%p2879) target = $region99
        $region98: #{tpu_custom_call.1} parent=94 // pred_region
          %s2882 = sand.u32 %s243, 1
          %s2883 = scalar_lea.sflag [#allocation9], %s2882
          %s2884 = sand.u32 %s243, 1
          %s2885 = smul.addr %s2884, 16
          %s2886 = scalar_lea.vmem [#allocation16], %s2885
          %2888 = dma.done %s2883, 256
        $region99: #{tpu_custom_call.1} parent=94 // pred_fallthru
          _
      $region95: #{tpu_custom_call.1} parent=5 // pred_fallthru
        _
    $region6: #{tpu_custom_call.1} parent=1 // loop_footer
      %s25 = sadd.s32 1, %s21
    $region7: #{tpu_custom_call.1} parent=1 // loop_footer_branch
      %20 = sbr.rel target = $region3
    $region8: #{tpu_custom_call.1} parent=1 // loop_exit
      _
    %2889 = vsyncpa [#allocation8], 1
    %s2890 = scalar_lea.sflag [#allocation8], 1
    %2891 = vsyncpa %s2890, 1
    %2892 = vsyncpa [#allocation11], 1
    %2893 = vsyncpa [#allocation14], 1
    %2894 = vsyncpa [#allocation9], 1
    %s2895 = scalar_lea.sflag [#allocation9], 1
    %2896 = vsyncpa %s2895, 1

</llo_original>
